<compile_context>
chip_gen: v7x
topology: tpu7x:2x2x1
jax: 0.10.0
libtpu: 0.0.40
codegen_flags: <defaults>
</compile_context>

<pallas_src>
import math
import functools

import jax
import jax.numpy as jnp
from jax import lax
from jax.experimental import pallas as pl
from jax.experimental.pallas import tpu as pltpu


def _silu(x):
    return x * jax.nn.sigmoid(x)


def _softplus(x):
    # numerically safe softplus, same formula used in kernel and reference
    return jnp.where(x > 20.0, x, jnp.log1p(jnp.exp(jnp.minimum(x, 20.0))))


def _mamba_layer_kernel(d_inner, d_state, d_conv, dt_rank, chunk, eps,
                        x_ref, g_ref, beta_ref, win_ref, cw_ref, cb_ref,
                        wx_ref, wdt_ref, bdt_ref, aT_ref, dvec_ref, wout_ref,
                        out_ref,
                        pad_ref, xdbl_ref, delta_ref, u_ref, z_ref, y_ref):
    """One grid step == one batch element.  LayerNorm, in_proj, causal depthwise
    conv, x_proj, dt_proj, fused selective scan, gating and out_proj all in-kernel."""
    L = x_ref.shape[1]
    N = d_state
    D = d_inner

    xb = x_ref[0]                                            # (L, C)

    # ---- LayerNorm(dim) ----
    mu = jnp.mean(xb, axis=-1, keepdims=True)
    var = jnp.mean((xb - mu) ** 2, axis=-1, keepdims=True)
    xn = (xb - mu) * lax.rsqrt(var + eps) * g_ref[...] + beta_ref[...]

    # ---- in_proj (no bias): (L, C) @ (C, 2*d_inner) ----
    xz = jnp.dot(xn, win_ref[...], preferred_element_type=jnp.float32)
    xc = xz[:, :D]                                           # conv branch
    z_ref[...] = xz[:, D:]                                   # gate branch (stashed)

    # ---- causal depthwise conv1d via a pre-padded scratch ----
    # Zero the leading pad rows every step: scratch is per-TensorCore, and the
    # batch grid axis may be split across cores, so a program_id==0 guard is unsafe.
    P = pad_ref.shape[0] - L                                 # leading zero rows (>= d_conv-1)
    if P > 0:
        pad_ref[0:P, :] = jnp.zeros((P, D), jnp.float32)     # one vreg-row, cheap
    pad_ref[P:P + L, :] = xc
    base = P - (d_conv - 1)
    acc = pad_ref[base:base + L, :] * cw_ref[0:1, :]
    for k in range(1, d_conv):
        acc = acc + pad_ref[base + k:base + k + L, :] * cw_ref[k:k + 1, :]
    u = _silu(acc + cb_ref[...])                             # (L, D)
    u_ref[...] = u

    # ---- x_proj: columns pre-ordered/padded in the wrapper as [B | C | dt | 0-pad] ----
    x_dbl = jnp.dot(u, wx_ref[...], preferred_element_type=jnp.float32)   # (L, >=128)
    xdbl_ref[...] = x_dbl                                    # lane-dense, unmasked stores

    # ---- dt_proj as VPU broadcast-MACs (contraction K = dt_rank is tiny) ----
    dt = x_dbl[:, 2 * N:2 * N + dt_rank]                     # (L, dt_rank)
    dp = dt[:, 0:1] * wdt_ref[0:1, :]
    for r in range(1, dt_rank):
        dp = dp + dt[:, r:r + 1] * wdt_ref[r:r + 1, :]
    delta_ref[...] = _softplus(dp + bdt_ref[...])            # (L, D)

    aT = aT_ref[...]                                         # (N, D), A = -exp(A_log)
    dvec = dvec_ref[...]                                     # (1, D)

    # ---- fused selective scan (chunk timesteps per fori_loop iteration, unrolled):
    #        h_t = exp(delta_t * A) * h + (delta_t * u_t) (x) B_t
    #        y_t = sum_n C_t[n] * h_t[n, :]
    #      dA / dBu are recomputed per step (no (L, N, D) scratch); the exp runs on
    #      the EUP and is independent of the h-chain, so it overlaps the recurrence.
    def chunk_body(c, h):
        t0 = pl.multiple_of(c * chunk, chunk)
        delta_c = delta_ref[pl.ds(t0, chunk), :]             # (chunk, D)
        u_c = u_ref[pl.ds(t0, chunk), :]                     # (chunk, D)
        z_c = z_ref[pl.ds(t0, chunk), :]                     # (chunk, D)
        du_c = delta_c * u_c                                 # (chunk, D), per chunk
        bc_c = xdbl_ref[pl.ds(t0, chunk), :]                 # (chunk, 128) lane-dense load
        bcT = bc_c[:, :2 * N].T                              # (2N, chunk) one small transpose
        y_rows = []
        for j in range(chunk):                               # static unroll over timesteps
            dA_j = jnp.exp(delta_c[j:j + 1, :] * aT)         # (N, D), EUP, off the h chain
            dbu_j = du_c[j:j + 1, :] * bcT[:N, j:j + 1]      # (N, D)
            h = dA_j * h + dbu_j                             # recurrence
            y_rows.append(jnp.sum(bcT[N:2 * N, j:j + 1] * h,
                                  axis=0, keepdims=True))    # (1, D) fused C-contraction
        y_c = jnp.concatenate(y_rows, axis=0)                # (chunk, D)
        y_c = (y_c + u_c * dvec) * _silu(z_c)                # fused D-skip + gate
        y_ref[pl.ds(t0, chunk), :] = y_c
        return h

    lax.fori_loop(0, L // chunk, chunk_body,
                  jnp.zeros((N, D), jnp.float32))

    # ---- out_proj (no bias) ----
    out_ref[0] = jnp.dot(y_ref[...], wout_ref[...], preferred_element_type=jnp.float32)


def mamba_layer_forward(x, H, W, T, params):
    """Pallas implementation of MambaLayer.forward (downsample=None).
    Returns (x_out, H, W, T, x_out, H, W, T) like the PyTorch module."""
    B, L, C = x.shape
    d_inner = params['W_in'].shape[1] // 2
    d_state = params['A_logT'].shape[0]
    d_conv = params['conv_w'].shape[0]
    dt_rank = params['W_dt'].shape[0]

    # timesteps per scan-loop iteration (statically unrolled inside the kernel);
    # scaled down when the recurrent (N, D) state tile is large to avoid vreg spills.
    nd = d_state * d_inner
    pref = 8 if nd <= 8 * 1024 else (4 if nd <= 16 * 1024 else 2)
    chunk = max(c for c in (8, 4, 2, 1) if c <= pref and L % c == 0)
    # leading zero rows of the conv pad scratch, rounded up to a sublane multiple
    conv_pad = 8 * ((d_conv - 1 + 7) // 8) if d_conv > 1 else 0

    # Constant preprocessing done once on the host side of the call:
    #   A = -exp(A_log); x_proj columns reordered to [B | C | dt] and zero-padded
    #   to a multiple of 128 so the MXU output / scratch stores are lane-dense.
    A_T = -jnp.exp(params['A_logT'].astype(jnp.float32))              # (d_state, d_inner)
    W_x = params['W_x'].astype(jnp.float32)
    W_x_r = jnp.concatenate(
        [W_x[:, dt_rank:dt_rank + d_state],                           # B columns
         W_x[:, dt_rank + d_state:],                                  # C columns
         W_x[:, :dt_rank]], axis=1)                                   # dt columns last
    xcols = 2 * d_state + dt_rank
    xcols_pad = max(128, ((xcols + 127) // 128) * 128)
    if xcols_pad > xcols:
        W_x_r = jnp.concatenate(
            [W_x_r, jnp.zeros((d_inner, xcols_pad - xcols), jnp.float32)], axis=1)

    weights = [
        params['gamma'], params['beta'], params['W_in'], params['conv_w'],
        params['conv_b'], W_x_r, params['W_dt'], params['b_dt'],
        A_T, params['D'], params['W_out'],
    ]
    weights = [w.astype(jnp.float32) for w in weights]

    kernel = functools.partial(
        _mamba_layer_kernel, d_inner, d_state, d_conv, dt_rank, chunk, 1e-5)

    def full2d(arr):
        return pl.BlockSpec(arr.shape, lambda b: (0, 0))

    in_specs = [pl.BlockSpec((1, L, C), lambda b: (b, 0, 0))]
    in_specs += [full2d(w) for w in weights]

    scratch_shapes = [
        pltpu.VMEM((L + conv_pad, d_inner), jnp.float32),   # pre-padded conv input
        pltpu.VMEM((L, xcols_pad), jnp.float32),            # x_proj output [B | C | dt | 0]
        pltpu.VMEM((L, d_inner), jnp.float32),              # delta
        pltpu.VMEM((L, d_inner), jnp.float32),              # u  (conv branch)
        pltpu.VMEM((L, d_inner), jnp.float32),              # z  (gate branch)
        pltpu.VMEM((L, d_inner), jnp.float32),              # scan output y (gated)
    ]

    # VMEM budget: actual requirement estimate (+25% headroom), capped at ~80% of the
    # physical per-core VMEM reported by the runtime (64 MiB on v7x, 128 MiB on v5e/v6e).
    f32b = 4
    scratch_bytes = ((L + conv_pad) * d_inner + L * xcols_pad
                     + 3 * L * d_inner) * f32b + L * d_inner * f32b
    io_bytes = 2 * 2 * L * C * f32b                          # double-buffered in/out blocks
    weight_bytes = sum(int(w.size) for w in weights) * f32b
    need = scratch_bytes + io_bytes + weight_bytes
    try:
        vmem_cap = int(pltpu.get_tpu_info().vmem_capacity_bytes)
    except Exception:
        vmem_cap = 64 << 20
    vmem_limit = int(min(int(0.80 * vmem_cap), max(need + need // 4, 32 << 20)))

    y = pl.pallas_call(
        kernel,
        out_shape=jax.ShapeDtypeStruct((B, L, C), jnp.float32),
        grid_spec=pltpu.PrefetchScalarGridSpec(
            num_scalar_prefetch=0,
            grid=(B,),
            in_specs=in_specs,
            out_specs=pl.BlockSpec((1, L, C), lambda b: (b, 0, 0)),
            scratch_shapes=scratch_shapes,
        ),
        compiler_params=pltpu.CompilerParams(
            # Batch elements are independent; only helps on multi-TC chips (v7x).
            dimension_semantics=("parallel",),
            vmem_limit_bytes=vmem_limit,
        ),
    )(x.astype(jnp.float32), *weights)

    y = y.astype(x.dtype)
    # TODO(synk): downsample (PatchMerging) branch not implemented; module is built with downsample=None.
    # TODO(synk): two-phase variant (produce u/delta/B/C, then scan over a parallel d_inner-tile grid
    #             axis) for v7x 2-TC utilisation at batch=1 and for long-L VMEM pressure; also a
    #             lane-dense (L/4, 4*C) I/O reshape when dim < 128.
    return (y, H, W, T, y, H, W, T)


# ---------------- pure-JAX reference (same math, for validation) ----------------
def mamba_layer_ref(x, params):
    d_inner = params['W_in'].shape[1] // 2
    d_state = params['A_logT'].shape[0]
    d_conv = params['conv_w'].shape[0]
    dt_rank = params['W_dt'].shape[0]
    B, L, C = x.shape

    mu = x.mean(-1, keepdims=True)
    var = ((x - mu) ** 2).mean(-1, keepdims=True)
    xn = (x - mu) / jnp.sqrt(var + 1e-5) * params['gamma'][0] + params['beta'][0]

    xz = xn @ params['W_in']
    xc, z = xz[..., :d_inner], xz[..., d_inner:]

    xp = jnp.pad(xc, ((0, 0), (d_conv - 1, 0), (0, 0)))
    u = sum(xp[:, k:k + L, :] * params['conv_w'][k][None, None, :]
            for k in range(d_conv))
    u = _silu(u + params['conv_b'][0])

    x_dbl = u @ params['W_x']
    dt = x_dbl[..., :dt_rank]
    Bs = x_dbl[..., dt_rank:dt_rank + d_state]
    Cs = x_dbl[..., dt_rank + d_state:]
    delta = _softplus(dt @ params['W_dt'] + params['b_dt'][0])

    A_T = -jnp.exp(params['A_logT'])                       # (d_state, d_inner)
    dA = jnp.exp(delta[:, :, None, :] * A_T[None, None])   # (B, L, N, D)
    dBu = (delta * u)[:, :, None, :] * Bs[..., None]       # (B, L, N, D)

    def step(h, inp):
        dA_t, dBu_t = inp
        h = dA_t * h + dBu_t
        return h, h

    def scan_b(dA_b, dBu_b):
        _, Hh = lax.scan(step, jnp.zeros((d_state, d_inner), jnp.float32),
                         (dA_b, dBu_b))
        return Hh

    Hh = jax.vmap(scan_b)(dA, dBu)                         # (B, L, N, D)
    y = jnp.sum(Cs[..., None] * Hh, axis=2)
    y = y + u * params['D'][0]
    y = y * _silu(z)
    return y @ params['W_out']


if __name__ == "__main__":
    key = jax.random.PRNGKey(0)
    B, Hs, Ws, Ts = 2, 4, 4, 4
    dim = 32
    d_state, d_conv, expand = 16, 4, 2
    d_inner = expand * dim
    dt_rank = math.ceil(dim / 16)
    L = Hs * Ws * Ts                                         # n_tokens = H*W*T

    ks = jax.random.split(key, 10)

    def rnd(k, shape, scale=0.1):
        return scale * jax.random.normal(k, shape, dtype=jnp.float32)

    params = {
        # LayerNorm(dim)
        'gamma': jnp.ones((1, dim), jnp.float32),
        'beta': jnp.zeros((1, dim), jnp.float32),
        # Mamba(d_model=dim, d_state=16, d_conv=4, expand=2)
        'W_in': rnd(ks[0], (dim, 2 * d_inner)),              # in_proj.weight.T
        'conv_w': rnd(ks[1], (d_conv, d_inner)),             # conv1d.weight (depthwise), (k, d_inner)
        'conv_b': rnd(ks[2], (1, d_inner)),                  # conv1d.bias
        'W_x': rnd(ks[3], (d_inner, dt_rank + 2 * d_state)), # x_proj.weight.T
        'W_dt': rnd(ks[4], (dt_rank, d_inner)),              # dt_proj.weight.T
        'b_dt': rnd(ks[5], (1, d_inner)),                    # dt_proj.bias
        'A_logT': jnp.log(jnp.broadcast_to(
            jnp.arange(1, d_state + 1, dtype=jnp.float32)[:, None],
            (d_state, d_inner))),                            # A_log transposed (d_state, d_inner)
        'D': jnp.ones((1, d_inner), jnp.float32),            # D
        'W_out': rnd(ks[6], (d_inner, dim)),                 # out_proj.weight.T
    }

    x = jax.random.normal(ks[7], (B, L, dim), dtype=jnp.float32)

    out_tuple = mamba_layer_forward(x, Hs, Ws, Ts, params)
    y = jax.block_until_ready(out_tuple[0])

    y_ref = mamba_layer_ref(x, params)
    max_err = float(jnp.max(jnp.abs(y - y_ref)))
    assert jnp.allclose(y, y_ref, atol=1e-4, rtol=1e-4), f"mismatch, max_err={max_err}"

    print("KERNEL_OK")
</pallas_src>

<mosaic_0001>
module attributes {stable_mosaic.version = 11 : i64} {
  func.func @_mamba_layer_kernel(%arg0: i32, %arg1: memref<1x64x32xf32, #tpu.memory_space<vmem>>, %arg2: memref<1x32xf32, #tpu.memory_space<vmem>>, %arg3: memref<1x32xf32, #tpu.memory_space<vmem>>, %arg4: memref<32x128xf32, #tpu.memory_space<vmem>>, %arg5: memref<4x64xf32, #tpu.memory_space<vmem>>, %arg6: memref<1x64xf32, #tpu.memory_space<vmem>>, %arg7: memref<64x128xf32, #tpu.memory_space<vmem>>, %arg8: memref<2x64xf32, #tpu.memory_space<vmem>>, %arg9: memref<1x64xf32, #tpu.memory_space<vmem>>, %arg10: memref<16x64xf32, #tpu.memory_space<vmem>>, %arg11: memref<1x64xf32, #tpu.memory_space<vmem>>, %arg12: memref<64x32xf32, #tpu.memory_space<vmem>>, %arg13: memref<1x64x32xf32, #tpu.memory_space<vmem>>, %arg14: memref<72x64xf32, #tpu.memory_space<vmem>>, %arg15: memref<64x128xf32, #tpu.memory_space<vmem>>, %arg16: memref<64x64xf32, #tpu.memory_space<vmem>>, %arg17: memref<64x64xf32, #tpu.memory_space<vmem>>, %arg18: memref<64x64xf32, #tpu.memory_space<vmem>>, %arg19: memref<64x64xf32, #tpu.memory_space<vmem>>) attributes {dimension_semantics = [#tpu.dimension_semantics<parallel>], iteration_bounds = array<i64: 2>, scalar_prefetch = 0 : i64, scratch_operands = 6 : i64, tpu.core_type = #tpu.core_type<tc>, window_params = [{transform_indices = @transform_0, window_bounds = array<i64: 1, 64, 32>}, {pipeline_mode = #tpu.pipeline_mode<synchronous>, transform_indices = @transform_1, window_bounds = array<i64: 1, 32>}, {pipeline_mode = #tpu.pipeline_mode<synchronous>, transform_indices = @transform_2, window_bounds = array<i64: 1, 32>}, {pipeline_mode = #tpu.pipeline_mode<synchronous>, transform_indices = @transform_3, window_bounds = array<i64: 32, 128>}, {pipeline_mode = #tpu.pipeline_mode<synchronous>, transform_indices = @transform_4, window_bounds = array<i64: 4, 64>}, {pipeline_mode = #tpu.pipeline_mode<synchronous>, transform_indices = @transform_5, window_bounds = array<i64: 1, 64>}, {pipeline_mode = #tpu.pipeline_mode<synchronous>, transform_indices = @transform_6, window_bounds = array<i64: 64, 128>}, {pipeline_mode = #tpu.pipeline_mode<synchronous>, transform_indices = @transform_7, window_bounds = array<i64: 2, 64>}, {pipeline_mode = #tpu.pipeline_mode<synchronous>, transform_indices = @transform_8, window_bounds = array<i64: 1, 64>}, {pipeline_mode = #tpu.pipeline_mode<synchronous>, transform_indices = @transform_9, window_bounds = array<i64: 16, 64>}, {pipeline_mode = #tpu.pipeline_mode<synchronous>, transform_indices = @transform_10, window_bounds = array<i64: 1, 64>}, {pipeline_mode = #tpu.pipeline_mode<synchronous>, transform_indices = @transform_11, window_bounds = array<i64: 64, 32>}, {transform_indices = @transform_12, window_bounds = array<i64: 1, 64, 32>}]} {
    %c0 = arith.constant 0 : index
    %c0_0 = arith.constant 0 : index
    %c0_1 = arith.constant 0 : index
    %0 = vector.load %arg1[%c0, %c0_0, %c0_1] : memref<1x64x32xf32, #tpu.memory_space<vmem>>, vector<1x64x32xf32>
    %1 = vector.shape_cast %0 : vector<1x64x32xf32> to vector<64x32xf32>
    %cst = arith.constant dense<0.000000e+00> : vector<64xf32>
    %2 = vector.multi_reduction <add>, %1, %cst [1] : vector<64x32xf32> to vector<64xf32>
    %3 = vector.shape_cast %2 : vector<64xf32> to vector<64x1xf32>
    %cst_2 = arith.constant 3.200000e+01 : f32
    %4 = vector.broadcast %cst_2 : f32 to vector<64x1xf32>
    %5 = arith.divf %3, %4 : vector<64x1xf32>
    %6 = vector.broadcast %5 : vector<64x1xf32> to vector<64x32xf32>
    %7 = arith.subf %1, %6 : vector<64x32xf32>
    %8 = arith.mulf %7, %7 : vector<64x32xf32>
    %cst_3 = arith.constant dense<0.000000e+00> : vector<64xf32>
    %9 = vector.multi_reduction <add>, %8, %cst_3 [1] : vector<64x32xf32> to vector<64xf32>
    %10 = vector.shape_cast %9 : vector<64xf32> to vector<64x1xf32>
    %cst_4 = arith.constant 3.200000e+01 : f32
    %11 = vector.broadcast %cst_4 : f32 to vector<64x1xf32>
    %12 = arith.divf %10, %11 : vector<64x1xf32>
    %13 = vector.broadcast %5 : vector<64x1xf32> to vector<64x32xf32>
    %14 = arith.subf %1, %13 : vector<64x32xf32>
    %cst_5 = arith.constant 9.99999974E-6 : f32
    %15 = vector.broadcast %cst_5 : f32 to vector<64x1xf32>
    %16 = arith.addf %12, %15 : vector<64x1xf32>
    %17 = math.rsqrt %16 : vector<64x1xf32>
    %18 = vector.broadcast %17 : vector<64x1xf32> to vector<64x32xf32>
    %19 = arith.mulf %14, %18 : vector<64x32xf32>
    %c0_6 = arith.constant 0 : index
    %c0_7 = arith.constant 0 : index
    %20 = vector.load %arg2[%c0_6, %c0_7] : memref<1x32xf32, #tpu.memory_space<vmem>>, vector<1x32xf32>
    %21 = vector.broadcast %20 : vector<1x32xf32> to vector<64x32xf32>
    %22 = arith.mulf %19, %21 : vector<64x32xf32>
    %c0_8 = arith.constant 0 : index
    %c0_9 = arith.constant 0 : index
    %23 = vector.load %arg3[%c0_8, %c0_9] : memref<1x32xf32, #tpu.memory_space<vmem>>, vector<1x32xf32>
    %24 = vector.broadcast %23 : vector<1x32xf32> to vector<64x32xf32>
    %25 = arith.addf %22, %24 : vector<64x32xf32>
    %c0_10 = arith.constant 0 : index
    %c0_11 = arith.constant 0 : index
    %26 = vector.load %arg4[%c0_10, %c0_11] : memref<32x128xf32, #tpu.memory_space<vmem>>, vector<32x128xf32>
    %cst_12 = arith.constant dense<0.000000e+00> : vector<64x128xf32>
    %27 = tpu.matmul %25, %26, %cst_12 {dimension_numbers = #tpu.dot_dimension_numbers<[1], [0], [0], [1], [0, 0, 1, 1], [], []>} : vector<64x32xf32>, vector<32x128xf32>, vector<64x128xf32> -> vector<64x128xf32>
    %28 = vector.extract_strided_slice %27 {offsets = [0, 0], sizes = [64, 64], strides = [1, 1]} : vector<64x128xf32> to vector<64x64xf32>
    %29 = vector.extract_strided_slice %27 {offsets = [0, 64], sizes = [64, 64], strides = [1, 1]} : vector<64x128xf32> to vector<64x64xf32>
    %c0_13 = arith.constant 0 : index
    %c0_14 = arith.constant 0 : index
    %30 = vector.load %arg18[%c0_13, %c0_14] : memref<64x64xf32, #tpu.memory_space<vmem>>, vector<64x64xf32>
    tpu.vector_store %arg18[%c0_13, %c0_14], %29 {strides = array<i32>} : memref<64x64xf32, #tpu.memory_space<vmem>>, vector<64x64xf32>,
    %cst_15 = arith.constant 0.000000e+00 : f32
    %31 = vector.broadcast %cst_15 : f32 to vector<8x64xf32>
    %c0_16 = arith.constant 0 : index
    %c0_17 = arith.constant 0 : index
    %32 = vector.load %arg14[%c0_16, %c0_17] : memref<72x64xf32, #tpu.memory_space<vmem>>, vector<8x64xf32>
    tpu.vector_store %arg14[%c0_16, %c0_17], %31 {strides = array<i32>} : memref<72x64xf32, #tpu.memory_space<vmem>>, vector<8x64xf32>,
    %c8 = arith.constant 8 : index
    %c0_18 = arith.constant 0 : index
    %33 = vector.load %arg14[%c8, %c0_18] : memref<72x64xf32, #tpu.memory_space<vmem>>, vector<64x64xf32>
    tpu.vector_store %arg14[%c8, %c0_18], %28 {strides = array<i32>} : memref<72x64xf32, #tpu.memory_space<vmem>>, vector<64x64xf32>,
    %c5 = arith.constant 5 : index
    %c0_19 = arith.constant 0 : index
    %34 = vector.load %arg14[%c5, %c0_19] : memref<72x64xf32, #tpu.memory_space<vmem>>, vector<64x64xf32>
    %c0_20 = arith.constant 0 : index
    %c0_21 = arith.constant 0 : index
    %35 = vector.load %arg5[%c0_20, %c0_21] : memref<4x64xf32, #tpu.memory_space<vmem>>, vector<1x64xf32>
    %36 = vector.broadcast %35 : vector<1x64xf32> to vector<64x64xf32>
    %37 = arith.mulf %34, %36 : vector<64x64xf32>
    %c6 = arith.constant 6 : index
    %c0_22 = arith.constant 0 : index
    %38 = vector.load %arg14[%c6, %c0_22] : memref<72x64xf32, #tpu.memory_space<vmem>>, vector<64x64xf32>
    %c1 = arith.constant 1 : index
    %c0_23 = arith.constant 0 : index
    %39 = vector.load %arg5[%c1, %c0_23] : memref<4x64xf32, #tpu.memory_space<vmem>>, vector<1x64xf32>
    %40 = vector.broadcast %39 : vector<1x64xf32> to vector<64x64xf32>
    %41 = arith.mulf %38, %40 : vector<64x64xf32>
    %42 = arith.addf %37, %41 : vector<64x64xf32>
    %c7 = arith.constant 7 : index
    %c0_24 = arith.constant 0 : index
    %43 = vector.load %arg14[%c7, %c0_24] : memref<72x64xf32, #tpu.memory_space<vmem>>, vector<64x64xf32>
    %c2 = arith.constant 2 : index
    %c0_25 = arith.constant 0 : index
    %44 = vector.load %arg5[%c2, %c0_25] : memref<4x64xf32, #tpu.memory_space<vmem>>, vector<1x64xf32>
    %45 = vector.broadcast %44 : vector<1x64xf32> to vector<64x64xf32>
    %46 = arith.mulf %43, %45 : vector<64x64xf32>
    %47 = arith.addf %42, %46 : vector<64x64xf32>
    %c8_26 = arith.constant 8 : index
    %c0_27 = arith.constant 0 : index
    %48 = vector.load %arg14[%c8_26, %c0_27] : memref<72x64xf32, #tpu.memory_space<vmem>>, vector<64x64xf32>
    %c3 = arith.constant 3 : index
    %c0_28 = arith.constant 0 : index
    %49 = vector.load %arg5[%c3, %c0_28] : memref<4x64xf32, #tpu.memory_space<vmem>>, vector<1x64xf32>
    %50 = vector.broadcast %49 : vector<1x64xf32> to vector<64x64xf32>
    %51 = arith.mulf %48, %50 : vector<64x64xf32>
    %52 = arith.addf %47, %51 : vector<64x64xf32>
    %c0_29 = arith.constant 0 : index
    %c0_30 = arith.constant 0 : index
    %53 = vector.load %arg6[%c0_29, %c0_30] : memref<1x64xf32, #tpu.memory_space<vmem>>, vector<1x64xf32>
    %54 = vector.broadcast %53 : vector<1x64xf32> to vector<64x64xf32>
    %55 = arith.addf %52, %54 : vector<64x64xf32>
    %56 = arith.negf %55 : vector<64x64xf32>
    %57 = math.exp %56 : vector<64x64xf32>
    %cst_31 = arith.constant 1.000000e+00 : f32
    %58 = vector.broadcast %cst_31 : f32 to vector<64x64xf32>
    %59 = arith.addf %58, %57 : vector<64x64xf32>
    %60 = arith.divf %58, %59 : vector<64x64xf32>
    %61 = arith.mulf %55, %60 : vector<64x64xf32>
    %c0_32 = arith.constant 0 : index
    %c0_33 = arith.constant 0 : index
    %62 = vector.load %arg17[%c0_32, %c0_33] : memref<64x64xf32, #tpu.memory_space<vmem>>, vector<64x64xf32>
    tpu.vector_store %arg17[%c0_32, %c0_33], %61 {strides = array<i32>} : memref<64x64xf32, #tpu.memory_space<vmem>>, vector<64x64xf32>,
    %c0_34 = arith.constant 0 : index
    %c0_35 = arith.constant 0 : index
    %63 = vector.load %arg7[%c0_34, %c0_35] : memref<64x128xf32, #tpu.memory_space<vmem>>, vector<64x128xf32>
    %cst_36 = arith.constant dense<0.000000e+00> : vector<64x128xf32>
    %64 = tpu.matmul %61, %63, %cst_36 {dimension_numbers = #tpu.dot_dimension_numbers<[1], [0], [0], [1], [0, 0, 1, 1], [], []>} : vector<64x64xf32>, vector<64x128xf32>, vector<64x128xf32> -> vector<64x128xf32>
    %c0_37 = arith.constant 0 : index
    %c0_38 = arith.constant 0 : index
    %65 = vector.load %arg15[%c0_37, %c0_38] : memref<64x128xf32, #tpu.memory_space<vmem>>, vector<64x128xf32>
    tpu.vector_store %arg15[%c0_37, %c0_38], %64 {strides = array<i32>} : memref<64x128xf32, #tpu.memory_space<vmem>>, vector<64x128xf32>,
    %66 = vector.extract_strided_slice %64 {offsets = [0, 32], sizes = [64, 2], strides = [1, 1]} : vector<64x128xf32> to vector<64x2xf32>
    %67 = vector.extract_strided_slice %66 {offsets = [0, 0], sizes = [64, 1], strides = [1, 1]} : vector<64x2xf32> to vector<64x1xf32>
    %c0_39 = arith.constant 0 : index
    %c0_40 = arith.constant 0 : index
    %68 = vector.load %arg8[%c0_39, %c0_40] : memref<2x64xf32, #tpu.memory_space<vmem>>, vector<1x64xf32>
    %69 = vector.broadcast %67 : vector<64x1xf32> to vector<64x64xf32>
    %70 = vector.broadcast %68 : vector<1x64xf32> to vector<64x64xf32>
    %71 = arith.mulf %69, %70 : vector<64x64xf32>
    %72 = vector.extract_strided_slice %66 {offsets = [0, 1], sizes = [64, 1], strides = [1, 1]} : vector<64x2xf32> to vector<64x1xf32>
    %c1_41 = arith.constant 1 : index
    %c0_42 = arith.constant 0 : index
    %73 = vector.load %arg8[%c1_41, %c0_42] : memref<2x64xf32, #tpu.memory_space<vmem>>, vector<1x64xf32>
    %74 = vector.broadcast %72 : vector<64x1xf32> to vector<64x64xf32>
    %75 = vector.broadcast %73 : vector<1x64xf32> to vector<64x64xf32>
    %76 = arith.mulf %74, %75 : vector<64x64xf32>
    %77 = arith.addf %71, %76 : vector<64x64xf32>
    %c0_43 = arith.constant 0 : index
    %c0_44 = arith.constant 0 : index
    %78 = vector.load %arg9[%c0_43, %c0_44] : memref<1x64xf32, #tpu.memory_space<vmem>>, vector<1x64xf32>
    %79 = vector.broadcast %78 : vector<1x64xf32> to vector<64x64xf32>
    %80 = arith.addf %77, %79 : vector<64x64xf32>
    %cst_45 = arith.constant 2.000000e+01 : f32
    %81 = vector.broadcast %cst_45 : f32 to vector<64x64xf32>
    %82 = arith.cmpf ogt, %80, %81 : vector<64x64xf32>
    %cst_46 = arith.constant 2.000000e+01 : f32
    %83 = vector.broadcast %cst_46 : f32 to vector<64x64xf32>
    %84 = arith.minimumf %80, %83 : vector<64x64xf32>
    %85 = math.exp %84 : vector<64x64xf32>
    %86 = math.log1p %85 : vector<64x64xf32>
    %87 = arith.select %82, %80, %86 : vector<64x64xi1>, vector<64x64xf32>
    %c0_47 = arith.constant 0 : index
    %c0_48 = arith.constant 0 : index
    %88 = vector.load %arg16[%c0_47, %c0_48] : memref<64x64xf32, #tpu.memory_space<vmem>>, vector<64x64xf32>
    tpu.vector_store %arg16[%c0_47, %c0_48], %87 {strides = array<i32>} : memref<64x64xf32, #tpu.memory_space<vmem>>, vector<64x64xf32>,
    %c0_49 = arith.constant 0 : index
    %c0_50 = arith.constant 0 : index
    %89 = vector.load %arg10[%c0_49, %c0_50] : memref<16x64xf32, #tpu.memory_space<vmem>>, vector<16x64xf32>
    %c0_51 = arith.constant 0 : index
    %c0_52 = arith.constant 0 : index
    %90 = vector.load %arg11[%c0_51, %c0_52] : memref<1x64xf32, #tpu.memory_space<vmem>>, vector<1x64xf32>
    %cst_53 = arith.constant 0.000000e+00 : f32
    %91 = vector.broadcast %cst_53 : f32 to vector<16x64xf32>
    %c0_i32 = arith.constant 0 : i32
    %c8_i32 = arith.constant 8 : i32
    %92 = arith.addi %c0_i32, %c8_i32 : i32
    %c1_i32 = arith.constant 1 : i32
    %93 = scf.for %arg20 = %c0_i32 to %92 step %c1_i32 iter_args(%arg21 = %91) -> (vector<16x64xf32>)  : i32 {
      %c8_i32_63 = arith.constant 8 : i32
      %100 = arith.muli %arg20, %c8_i32_63 : i32
      %101 = tpu.assume_multiple %100, 8 : i32
      %102 = arith.index_cast %101 : i32 to index
      %c0_64 = arith.constant 0 : index
      %103 = vector.load %arg16[%102, %c0_64] : memref<64x64xf32, #tpu.memory_space<vmem>>, vector<8x64xf32>
      %104 = arith.index_cast %101 : i32 to index
      %c0_65 = arith.constant 0 : index
      %105 = vector.load %arg17[%104, %c0_65] : memref<64x64xf32, #tpu.memory_space<vmem>>, vector<8x64xf32>
      %106 = arith.index_cast %101 : i32 to index
      %c0_66 = arith.constant 0 : index
      %107 = vector.load %arg18[%106, %c0_66] : memref<64x64xf32, #tpu.memory_space<vmem>>, vector<8x64xf32>
      %108 = arith.mulf %103, %105 : vector<8x64xf32>
      %109 = arith.index_cast %101 : i32 to index
      %c0_67 = arith.constant 0 : index
      %110 = vector.load %arg15[%109, %c0_67] : memref<64x128xf32, #tpu.memory_space<vmem>>, vector<8x128xf32>
      %111 = vector.extract_strided_slice %110 {offsets = [0, 0], sizes = [8, 32], strides = [1, 1]} : vector<8x128xf32> to vector<8x32xf32>
      %112 = tpu.transpose %111, [1, 0] : vector<8x32xf32> -> vector<32x8xf32>
      %113 = vector.extract_strided_slice %103 {offsets = [0, 0], sizes = [1, 64], strides = [1, 1]} : vector<8x64xf32> to vector<1x64xf32>
      %114 = vector.broadcast %113 : vector<1x64xf32> to vector<16x64xf32>
      %115 = arith.mulf %114, %89 : vector<16x64xf32>
      %116 = math.exp %115 : vector<16x64xf32>
      %117 = vector.extract_strided_slice %108 {offsets = [0, 0], sizes = [1, 64], strides = [1, 1]} : vector<8x64xf32> to vector<1x64xf32>
      %118 = vector.extract_strided_slice %112 {offsets = [0, 0], sizes = [16, 1], strides = [1, 1]} : vector<32x8xf32> to vector<16x1xf32>
      %119 = vector.broadcast %117 : vector<1x64xf32> to vector<16x64xf32>
      %120 = vector.broadcast %118 : vector<16x1xf32> to vector<16x64xf32>
      %121 = arith.mulf %119, %120 : vector<16x64xf32>
      %122 = arith.mulf %116, %arg21 : vector<16x64xf32>
      %123 = arith.addf %122, %121 : vector<16x64xf32>
      %124 = vector.extract_strided_slice %112 {offsets = [16, 0], sizes = [16, 1], strides = [1, 1]} : vector<32x8xf32> to vector<16x1xf32>
      %125 = vector.broadcast %124 : vector<16x1xf32> to vector<16x64xf32>
      %126 = arith.mulf %125, %123 : vector<16x64xf32>
      %cst_68 = arith.constant dense<0.000000e+00> : vector<64xf32>
      %127 = vector.multi_reduction <add>, %126, %cst_68 [0] : vector<16x64xf32> to vector<64xf32>
      %128 = vector.shape_cast %127 : vector<64xf32> to vector<1x64xf32>
      %129 = vector.extract_strided_slice %103 {offsets = [1, 0], sizes = [1, 64], strides = [1, 1]} : vector<8x64xf32> to vector<1x64xf32>
      %130 = vector.broadcast %129 : vector<1x64xf32> to vector<16x64xf32>
      %131 = arith.mulf %130, %89 : vector<16x64xf32>
      %132 = math.exp %131 : vector<16x64xf32>
      %133 = vector.extract_strided_slice %108 {offsets = [1, 0], sizes = [1, 64], strides = [1, 1]} : vector<8x64xf32> to vector<1x64xf32>
      %134 = vector.extract_strided_slice %112 {offsets = [0, 1], sizes = [16, 1], strides = [1, 1]} : vector<32x8xf32> to vector<16x1xf32>
      %135 = vector.broadcast %133 : vector<1x64xf32> to vector<16x64xf32>
      %136 = vector.broadcast %134 : vector<16x1xf32> to vector<16x64xf32>
      %137 = arith.mulf %135, %136 : vector<16x64xf32>
      %138 = arith.mulf %132, %123 : vector<16x64xf32>
      %139 = arith.addf %138, %137 : vector<16x64xf32>
      %140 = vector.extract_strided_slice %112 {offsets = [16, 1], sizes = [16, 1], strides = [1, 1]} : vector<32x8xf32> to vector<16x1xf32>
      %141 = vector.broadcast %140 : vector<16x1xf32> to vector<16x64xf32>
      %142 = arith.mulf %141, %139 : vector<16x64xf32>
      %cst_69 = arith.constant dense<0.000000e+00> : vector<64xf32>
      %143 = vector.multi_reduction <add>, %142, %cst_69 [0] : vector<16x64xf32> to vector<64xf32>
      %144 = vector.shape_cast %143 : vector<64xf32> to vector<1x64xf32>
      %145 = vector.extract_strided_slice %103 {offsets = [2, 0], sizes = [1, 64], strides = [1, 1]} : vector<8x64xf32> to vector<1x64xf32>
      %146 = vector.broadcast %145 : vector<1x64xf32> to vector<16x64xf32>
      %147 = arith.mulf %146, %89 : vector<16x64xf32>
      %148 = math.exp %147 : vector<16x64xf32>
      %149 = vector.extract_strided_slice %108 {offsets = [2, 0], sizes = [1, 64], strides = [1, 1]} : vector<8x64xf32> to vector<1x64xf32>
      %150 = vector.extract_strided_slice %112 {offsets = [0, 2], sizes = [16, 1], strides = [1, 1]} : vector<32x8xf32> to vector<16x1xf32>
      %151 = vector.broadcast %149 : vector<1x64xf32> to vector<16x64xf32>
      %152 = vector.broadcast %150 : vector<16x1xf32> to vector<16x64xf32>
      %153 = arith.mulf %151, %152 : vector<16x64xf32>
      %154 = arith.mulf %148, %139 : vector<16x64xf32>
      %155 = arith.addf %154, %153 : vector<16x64xf32>
      %156 = vector.extract_strided_slice %112 {offsets = [16, 2], sizes = [16, 1], strides = [1, 1]} : vector<32x8xf32> to vector<16x1xf32>
      %157 = vector.broadcast %156 : vector<16x1xf32> to vector<16x64xf32>
      %158 = arith.mulf %157, %155 : vector<16x64xf32>
      %cst_70 = arith.constant dense<0.000000e+00> : vector<64xf32>
      %159 = vector.multi_reduction <add>, %158, %cst_70 [0] : vector<16x64xf32> to vector<64xf32>
      %160 = vector.shape_cast %159 : vector<64xf32> to vector<1x64xf32>
      %161 = vector.extract_strided_slice %103 {offsets = [3, 0], sizes = [1, 64], strides = [1, 1]} : vector<8x64xf32> to vector<1x64xf32>
      %162 = vector.broadcast %161 : vector<1x64xf32> to vector<16x64xf32>
      %163 = arith.mulf %162, %89 : vector<16x64xf32>
      %164 = math.exp %163 : vector<16x64xf32>
      %165 = vector.extract_strided_slice %108 {offsets = [3, 0], sizes = [1, 64], strides = [1, 1]} : vector<8x64xf32> to vector<1x64xf32>
      %166 = vector.extract_strided_slice %112 {offsets = [0, 3], sizes = [16, 1], strides = [1, 1]} : vector<32x8xf32> to vector<16x1xf32>
      %167 = vector.broadcast %165 : vector<1x64xf32> to vector<16x64xf32>
      %168 = vector.broadcast %166 : vector<16x1xf32> to vector<16x64xf32>
      %169 = arith.mulf %167, %168 : vector<16x64xf32>
      %170 = arith.mulf %164, %155 : vector<16x64xf32>
      %171 = arith.addf %170, %169 : vector<16x64xf32>
      %172 = vector.extract_strided_slice %112 {offsets = [16, 3], sizes = [16, 1], strides = [1, 1]} : vector<32x8xf32> to vector<16x1xf32>
      %173 = vector.broadcast %172 : vector<16x1xf32> to vector<16x64xf32>
      %174 = arith.mulf %173, %171 : vector<16x64xf32>
      %cst_71 = arith.constant dense<0.000000e+00> : vector<64xf32>
      %175 = vector.multi_reduction <add>, %174, %cst_71 [0] : vector<16x64xf32> to vector<64xf32>
      %176 = vector.shape_cast %175 : vector<64xf32> to vector<1x64xf32>
      %177 = vector.extract_strided_slice %103 {offsets = [4, 0], sizes = [1, 64], strides = [1, 1]} : vector<8x64xf32> to vector<1x64xf32>
      %178 = vector.broadcast %177 : vector<1x64xf32> to vector<16x64xf32>
      %179 = arith.mulf %178, %89 : vector<16x64xf32>
      %180 = math.exp %179 : vector<16x64xf32>
      %181 = vector.extract_strided_slice %108 {offsets = [4, 0], sizes = [1, 64], strides = [1, 1]} : vector<8x64xf32> to vector<1x64xf32>
      %182 = vector.extract_strided_slice %112 {offsets = [0, 4], sizes = [16, 1], strides = [1, 1]} : vector<32x8xf32> to vector<16x1xf32>
      %183 = vector.broadcast %181 : vector<1x64xf32> to vector<16x64xf32>
      %184 = vector.broadcast %182 : vector<16x1xf32> to vector<16x64xf32>
      %185 = arith.mulf %183, %184 : vector<16x64xf32>
      %186 = arith.mulf %180, %171 : vector<16x64xf32>
      %187 = arith.addf %186, %185 : vector<16x64xf32>
      %188 = vector.extract_strided_slice %112 {offsets = [16, 4], sizes = [16, 1], strides = [1, 1]} : vector<32x8xf32> to vector<16x1xf32>
      %189 = vector.broadcast %188 : vector<16x1xf32> to vector<16x64xf32>
      %190 = arith.mulf %189, %187 : vector<16x64xf32>
      %cst_72 = arith.constant dense<0.000000e+00> : vector<64xf32>
      %191 = vector.multi_reduction <add>, %190, %cst_72 [0] : vector<16x64xf32> to vector<64xf32>
      %192 = vector.shape_cast %191 : vector<64xf32> to vector<1x64xf32>
      %193 = vector.extract_strided_slice %103 {offsets = [5, 0], sizes = [1, 64], strides = [1, 1]} : vector<8x64xf32> to vector<1x64xf32>
      %194 = vector.broadcast %193 : vector<1x64xf32> to vector<16x64xf32>
      %195 = arith.mulf %194, %89 : vector<16x64xf32>
      %196 = math.exp %195 : vector<16x64xf32>
      %197 = vector.extract_strided_slice %108 {offsets = [5, 0], sizes = [1, 64], strides = [1, 1]} : vector<8x64xf32> to vector<1x64xf32>
      %198 = vector.extract_strided_slice %112 {offsets = [0, 5], sizes = [16, 1], strides = [1, 1]} : vector<32x8xf32> to vector<16x1xf32>
      %199 = vector.broadcast %197 : vector<1x64xf32> to vector<16x64xf32>
      %200 = vector.broadcast %198 : vector<16x1xf32> to vector<16x64xf32>
      %201 = arith.mulf %199, %200 : vector<16x64xf32>
      %202 = arith.mulf %196, %187 : vector<16x64xf32>
      %203 = arith.addf %202, %201 : vector<16x64xf32>
      %204 = vector.extract_strided_slice %112 {offsets = [16, 5], sizes = [16, 1], strides = [1, 1]} : vector<32x8xf32> to vector<16x1xf32>
      %205 = vector.broadcast %204 : vector<16x1xf32> to vector<16x64xf32>
      %206 = arith.mulf %205, %203 : vector<16x64xf32>
      %cst_73 = arith.constant dense<0.000000e+00> : vector<64xf32>
      %207 = vector.multi_reduction <add>, %206, %cst_73 [0] : vector<16x64xf32> to vector<64xf32>
      %208 = vector.shape_cast %207 : vector<64xf32> to vector<1x64xf32>
      %209 = vector.extract_strided_slice %103 {offsets = [6, 0], sizes = [1, 64], strides = [1, 1]} : vector<8x64xf32> to vector<1x64xf32>
      %210 = vector.broadcast %209 : vector<1x64xf32> to vector<16x64xf32>
      %211 = arith.mulf %210, %89 : vector<16x64xf32>
      %212 = math.exp %211 : vector<16x64xf32>
      %213 = vector.extract_strided_slice %108 {offsets = [6, 0], sizes = [1, 64], strides = [1, 1]} : vector<8x64xf32> to vector<1x64xf32>
      %214 = vector.extract_strided_slice %112 {offsets = [0, 6], sizes = [16, 1], strides = [1, 1]} : vector<32x8xf32> to vector<16x1xf32>
      %215 = vector.broadcast %213 : vector<1x64xf32> to vector<16x64xf32>
      %216 = vector.broadcast %214 : vector<16x1xf32> to vector<16x64xf32>
      %217 = arith.mulf %215, %216 : vector<16x64xf32>
      %218 = arith.mulf %212, %203 : vector<16x64xf32>
      %219 = arith.addf %218, %217 : vector<16x64xf32>
      %220 = vector.extract_strided_slice %112 {offsets = [16, 6], sizes = [16, 1], strides = [1, 1]} : vector<32x8xf32> to vector<16x1xf32>
      %221 = vector.broadcast %220 : vector<16x1xf32> to vector<16x64xf32>
      %222 = arith.mulf %221, %219 : vector<16x64xf32>
      %cst_74 = arith.constant dense<0.000000e+00> : vector<64xf32>
      %223 = vector.multi_reduction <add>, %222, %cst_74 [0] : vector<16x64xf32> to vector<64xf32>
      %224 = vector.shape_cast %223 : vector<64xf32> to vector<1x64xf32>
      %225 = vector.extract_strided_slice %103 {offsets = [7, 0], sizes = [1, 64], strides = [1, 1]} : vector<8x64xf32> to vector<1x64xf32>
      %226 = vector.broadcast %225 : vector<1x64xf32> to vector<16x64xf32>
      %227 = arith.mulf %226, %89 : vector<16x64xf32>
      %228 = math.exp %227 : vector<16x64xf32>
      %229 = vector.extract_strided_slice %108 {offsets = [7, 0], sizes = [1, 64], strides = [1, 1]} : vector<8x64xf32> to vector<1x64xf32>
      %230 = vector.extract_strided_slice %112 {offsets = [0, 7], sizes = [16, 1], strides = [1, 1]} : vector<32x8xf32> to vector<16x1xf32>
      %231 = vector.broadcast %229 : vector<1x64xf32> to vector<16x64xf32>
      %232 = vector.broadcast %230 : vector<16x1xf32> to vector<16x64xf32>
      %233 = arith.mulf %231, %232 : vector<16x64xf32>
      %234 = arith.mulf %228, %219 : vector<16x64xf32>
      %235 = arith.addf %234, %233 : vector<16x64xf32>
      %236 = vector.extract_strided_slice %112 {offsets = [16, 7], sizes = [16, 1], strides = [1, 1]} : vector<32x8xf32> to vector<16x1xf32>
      %237 = vector.broadcast %236 : vector<16x1xf32> to vector<16x64xf32>
      %238 = arith.mulf %237, %235 : vector<16x64xf32>
      %cst_75 = arith.constant dense<0.000000e+00> : vector<64xf32>
      %239 = vector.multi_reduction <add>, %238, %cst_75 [0] : vector<16x64xf32> to vector<64xf32>
      %240 = vector.shape_cast %239 : vector<64xf32> to vector<1x64xf32>
      %241 = tpu.concatenate %128, %144, %160, %176, %192, %208, %224, %240 in 0 : vector<1x64xf32>, vector<1x64xf32>, vector<1x64xf32>, vector<1x64xf32>, vector<1x64xf32>, vector<1x64xf32>, vector<1x64xf32>, vector<1x64xf32> -> vector<8x64xf32>
      %242 = vector.broadcast %90 : vector<1x64xf32> to vector<8x64xf32>
      %243 = arith.mulf %105, %242 : vector<8x64xf32>
      %244 = arith.addf %241, %243 : vector<8x64xf32>
      %245 = arith.negf %107 : vector<8x64xf32>
      %246 = math.exp %245 : vector<8x64xf32>
      %cst_76 = arith.constant 1.000000e+00 : f32
      %247 = vector.broadcast %cst_76 : f32 to vector<8x64xf32>
      %248 = arith.addf %247, %246 : vector<8x64xf32>
      %249 = arith.divf %247, %248 : vector<8x64xf32>
      %250 = arith.mulf %107, %249 : vector<8x64xf32>
      %251 = arith.mulf %244, %250 : vector<8x64xf32>
      %252 = arith.index_cast %101 : i32 to index
      %c0_77 = arith.constant 0 : index
      %253 = vector.load %arg19[%252, %c0_77] : memref<64x64xf32, #tpu.memory_space<vmem>>, vector<8x64xf32>
      tpu.vector_store %arg19[%252, %c0_77], %251 {strides = array<i32>} : memref<64x64xf32, #tpu.memory_space<vmem>>, vector<8x64xf32>,
      scf.yield %235 : vector<16x64xf32>
    }
    %c8_i32_54 = arith.constant 8 : i32
    %c0_55 = arith.constant 0 : index
    %c0_56 = arith.constant 0 : index
    %94 = vector.load %arg19[%c0_55, %c0_56] : memref<64x64xf32, #tpu.memory_space<vmem>>, vector<64x64xf32>
    %c0_57 = arith.constant 0 : index
    %c0_58 = arith.constant 0 : index
    %95 = vector.load %arg12[%c0_57, %c0_58] : memref<64x32xf32, #tpu.memory_space<vmem>>, vector<64x32xf32>
    %cst_59 = arith.constant dense<0.000000e+00> : vector<64x32xf32>
    %96 = tpu.matmul %94, %95, %cst_59 {dimension_numbers = #tpu.dot_dimension_numbers<[1], [0], [0], [1], [0, 0, 1, 1], [], []>} : vector<64x64xf32>, vector<64x32xf32>, vector<64x32xf32> -> vector<64x32xf32>
    %c0_60 = arith.constant 0 : index
    %c0_61 = arith.constant 0 : index
    %c0_62 = arith.constant 0 : index
    %97 = vector.load %arg13[%c0_60, %c0_61, %c0_62] : memref<1x64x32xf32, #tpu.memory_space<vmem>>, vector<1x64x32xf32>
    %98 = vector.shape_cast %97 : vector<1x64x32xf32> to vector<64x32xf32>
    %99 = vector.shape_cast %96 : vector<64x32xf32> to vector<1x64x32xf32>
    tpu.vector_store %arg13[%c0_60, %c0_61, %c0_62], %99 {strides = array<i32>} : memref<1x64x32xf32, #tpu.memory_space<vmem>>, vector<1x64x32xf32>,
    return
  }
  func.func @transform_0(%arg0: i32) -> (i32, i32, i32) {
    %c0_i32 = arith.constant 0 : i32
    %c0_i32_0 = arith.constant 0 : i32
    %c0_i32_1 = arith.constant 0 : i32
    return %arg0, %c0_i32, %c0_i32_0 : i32, i32, i32
  }
  func.func @transform_1(%arg0: i32) -> (i32, i32) {
    %c0_i32 = arith.constant 0 : i32
    %c0_i32_0 = arith.constant 0 : i32
    %c0_i32_1 = arith.constant 0 : i32
    return %c0_i32, %c0_i32_0 : i32, i32
  }
  func.func @transform_2(%arg0: i32) -> (i32, i32) {
    %c0_i32 = arith.constant 0 : i32
    %c0_i32_0 = arith.constant 0 : i32
    %c0_i32_1 = arith.constant 0 : i32
    return %c0_i32, %c0_i32_0 : i32, i32
  }
  func.func @transform_3(%arg0: i32) -> (i32, i32) {
    %c0_i32 = arith.constant 0 : i32
    %c0_i32_0 = arith.constant 0 : i32
    %c0_i32_1 = arith.constant 0 : i32
    return %c0_i32, %c0_i32_0 : i32, i32
  }
  func.func @transform_4(%arg0: i32) -> (i32, i32) {
    %c0_i32 = arith.constant 0 : i32
    %c0_i32_0 = arith.constant 0 : i32
    %c0_i32_1 = arith.constant 0 : i32
    return %c0_i32, %c0_i32_0 : i32, i32
  }
  func.func @transform_5(%arg0: i32) -> (i32, i32) {
    %c0_i32 = arith.constant 0 : i32
    %c0_i32_0 = arith.constant 0 : i32
    %c0_i32_1 = arith.constant 0 : i32
    return %c0_i32, %c0_i32_0 : i32, i32
  }
  func.func @transform_6(%arg0: i32) -> (i32, i32) {
    %c0_i32 = arith.constant 0 : i32
    %c0_i32_0 = arith.constant 0 : i32
    %c0_i32_1 = arith.constant 0 : i32
    return %c0_i32, %c0_i32_0 : i32, i32
  }
  func.func @transform_7(%arg0: i32) -> (i32, i32) {
    %c0_i32 = arith.constant 0 : i32
    %c0_i32_0 = arith.constant 0 : i32
    %c0_i32_1 = arith.constant 0 : i32
    return %c0_i32, %c0_i32_0 : i32, i32
  }
  func.func @transform_8(%arg0: i32) -> (i32, i32) {
    %c0_i32 = arith.constant 0 : i32
    %c0_i32_0 = arith.constant 0 : i32
    %c0_i32_1 = arith.constant 0 : i32
    return %c0_i32, %c0_i32_0 : i32, i32
  }
  func.func @transform_9(%arg0: i32) -> (i32, i32) {
    %c0_i32 = arith.constant 0 : i32
    %c0_i32_0 = arith.constant 0 : i32
    %c0_i32_1 = arith.constant 0 : i32
    return %c0_i32, %c0_i32_0 : i32, i32
  }
  func.func @transform_10(%arg0: i32) -> (i32, i32) {
    %c0_i32 = arith.constant 0 : i32
    %c0_i32_0 = arith.constant 0 : i32
    %c0_i32_1 = arith.constant 0 : i32
    return %c0_i32, %c0_i32_0 : i32, i32
  }
  func.func @transform_11(%arg0: i32) -> (i32, i32) {
    %c0_i32 = arith.constant 0 : i32
    %c0_i32_0 = arith.constant 0 : i32
    %c0_i32_1 = arith.constant 0 : i32
    return %c0_i32, %c0_i32_0 : i32, i32
  }
  func.func @transform_12(%arg0: i32) -> (i32, i32, i32) {
    %c0_i32 = arith.constant 0 : i32
    %c0_i32_0 = arith.constant 0 : i32
    %c0_i32_1 = arith.constant 0 : i32
    return %arg0, %c0_i32, %c0_i32_0 : i32, i32, i32
  }
}

</mosaic_0001>

<llo_original>
// kernel: tpu_custom_call.1
$region0: #{tpu_custom_call.1}
  #allocation0 [shape = 'u32[]', space=smem, size = 0x4, offset = 0x4, fixed_abs, tag = 'smem constant byte address 0x4 - core index']
  #allocation1 [shape = 'u32[144,128]{1,0:T(1,128)}', space=vmem, size = 0x12000, scoped, tag = 'internal scratch']
  #allocation2 [shape = 'f32[72,64]{1,0:T(8,128)}', space=vmem, size = 0x9000, scoped, tag = 'scratch operand']
  #allocation3 [shape = 'f32[64,128]{1,0:T(8,128)}', space=vmem, size = 0x8000, scoped, tag = 'scratch operand']
  #allocation4 [shape = 'f32[64,64]{1,0:T(8,128)}', space=vmem, size = 0x8000, scoped, tag = 'scratch operand']
  #allocation5 [shape = 'f32[64,64]{1,0:T(8,128)}', space=vmem, size = 0x8000, scoped, tag = 'scratch operand']
  #allocation6 [shape = 'f32[64,64]{1,0:T(8,128)}', space=vmem, size = 0x8000, scoped, tag = 'scratch operand']
  #allocation7 [shape = 'f32[64,64]{1,0:T(8,128)}', space=vmem, size = 0x8000, scoped, tag = 'scratch operand']
  %s0 = inlined_call_operand.vmem [shape: f32[2,64,32], index: 0, kind: input, shape index: {}]
  %s1 = inlined_call_operand.vmem [shape: f32[1,32], index: 1, kind: input, shape index: {}]
  %s2 = inlined_call_operand.vmem [shape: f32[1,32], index: 2, kind: input, shape index: {}]
  %s3 = inlined_call_operand.vmem [shape: f32[32,128], index: 3, kind: input, shape index: {}]
  %s4 = inlined_call_operand.vmem [shape: f32[4,64], index: 4, kind: input, shape index: {}]
  %s5 = inlined_call_operand.vmem [shape: f32[1,64], index: 5, kind: input, shape index: {}]
  %s6 = inlined_call_operand.vmem [shape: f32[64,128], index: 6, kind: input, shape index: {}]
  %s7 = inlined_call_operand.vmem [shape: f32[2,64], index: 7, kind: input, shape index: {}]
  %s8 = inlined_call_operand.vmem [shape: f32[1,64], index: 8, kind: input, shape index: {}]
  %s9 = inlined_call_operand.vmem [shape: f32[16,64], index: 9, kind: input, shape index: {}]
  %s10 = inlined_call_operand.vmem [shape: f32[1,64], index: 10, kind: input, shape index: {}]
  %s11 = inlined_call_operand.vmem [shape: f32[64,32], index: 11, kind: input, shape index: {}]
  %s12 = inlined_call_operand.vmem [shape: f32[2,64,32], index: 12, kind: output, shape index: {}]
  %s13 = sld [smem:[#allocation0]]
  $region88: #{tpu_custom_call.1} parent=0
    _
  %s15 = ssub.s32 1, %s13
  %s16 = scalar_select 0, %s15, %s13
  loop: start=0, step=1, limit=4
  $region2: #{tpu_custom_call.1} parent=0 // loop_pre_header
    _
  $region3: #{tpu_custom_call.1} parent=0 // loop_header
    %s18 = sphi 0, %s22
    %p19 = scmp.ge.s32.totalorder %s18, 4
    %s28 = sphi 0, %s30
    %s31 = sphi 0, %s28
    %s32 = sphi 0, %s31
    %s48 = sphi 0, %s32
    %s52 = sphi 0, %s52
    %s54 = sphi 0, %s52
    %s55 = sphi 0, %s54
    %s69 = sphi 0, %s55
    %s73 = sphi 0, %s73
    %s75 = sphi 0, %s73
    %s76 = sphi 0, %s75
    %s90 = sphi 0, %s76
    %s94 = sphi 0, %s94
    %s96 = sphi 0, %s94
    %s97 = sphi 0, %s96
    %s111 = sphi 0, %s97
    %s115 = sphi 0, %s115
    %s117 = sphi 0, %s115
    %s118 = sphi 0, %s117
    %s132 = sphi 0, %s118
    %s136 = sphi 0, %s136
    %s138 = sphi 0, %s136
    %s139 = sphi 0, %s138
    %s153 = sphi 0, %s139
    %s157 = sphi 0, %s157
    %s159 = sphi 0, %s157
    %s160 = sphi 0, %s159
    %s174 = sphi 0, %s160
    %s178 = sphi 0, %s178
    %s180 = sphi 0, %s178
    %s181 = sphi 0, %s180
    %s195 = sphi 0, %s181
    %s199 = sphi 0, %s199
    %s201 = sphi 0, %s199
    %s202 = sphi 0, %s201
    %s216 = sphi 0, %s202
    %s220 = sphi 0, %s220
    %s222 = sphi 0, %s220
    %s223 = sphi 0, %s222
    %s237 = sphi 0, %s223
    %s241 = sphi 0, %s241
    %s243 = sphi 0, %s241
    %s244 = sphi 0, %s243
    %s258 = sphi 0, %s244
    %s262 = sphi 0, %s262
    %s264 = sphi 0, %s262
    %s265 = sphi 0, %s264
    %s279 = sphi 0, %s265
    %s285 = sphi 0, %s287
    %s288 = sphi 0, %s285
    %s289 = sphi 0, %s288
    %s305 = sphi 0, %s289
  $region4: #{tpu_custom_call.1} parent=0 // loop_header_branch
    %21 = sbr.rel (%p19) target = $region8
  $region5: #{tpu_custom_call.1} parent=0 // loop_body
    %s23 = ssub.s32 %s18, 1
    %s24 = ssub.s32 %s18, 2
    %s25 = sadd.s32 %s18, 1
    %s26 = ssub.s32 %s18, %s25
    %p27 = scmp.eq.s32.totalorder %s26, 0
    %s29 = sadd.s32 %s28, 1
    %s30 = scalar_select %p27, %s28, %s29
    %p33 = pneg %p27
    %p34 = scmp.eq.s32.totalorder %s18, 1
    %p35 = por %p33, %p34
    %p36 = scmp.ne.s32.totalorder %s28, %s31
    %p37 = scmp.eq.s32.totalorder %s18, 0
    %p38 = por %p36, %p37
    %p39 = scmp.ne.s32.totalorder %s28, %s31
    %p40 = scmp.eq.s32.totalorder %s23, 1
    %p41 = por %p39, %p40
    %p42 = scmp.ne.s32.totalorder %s31, %s32
    %p43 = scmp.eq.s32.totalorder %s23, 0
    %p44 = por %p42, %p43
    %p45 = scmp.ne.s32.totalorder %s31, %s32
    %p46 = scmp.eq.s32.totalorder %s24, 1
    %p47 = por %p45, %p46
    %p49 = scmp.ne.s32.totalorder %s32, %s48
    %p50 = scmp.eq.s32.totalorder %s24, 0
    %p51 = por %p49, %p50
    %s53 = sadd.s32 %s52, 1
    %p56 = scmp.eq.s32.totalorder %s18, 1
    %p57 = scmp.ne.s32.totalorder %s52, %s54
    %p58 = scmp.eq.s32.totalorder %s18, 0
    %p59 = por %p57, %p58
    %p60 = scmp.ne.s32.totalorder %s52, %s54
    %p61 = scmp.eq.s32.totalorder %s23, 1
    %p62 = por %p60, %p61
    %p63 = scmp.ne.s32.totalorder %s54, %s55
    %p64 = scmp.eq.s32.totalorder %s23, 0
    %p65 = por %p63, %p64
    %p66 = scmp.ne.s32.totalorder %s54, %s55
    %p67 = scmp.eq.s32.totalorder %s24, 1
    %p68 = por %p66, %p67
    %p70 = scmp.ne.s32.totalorder %s55, %s69
    %p71 = scmp.eq.s32.totalorder %s24, 0
    %p72 = por %p70, %p71
    %s74 = sadd.s32 %s73, 1
    %p77 = scmp.eq.s32.totalorder %s18, 1
    %p78 = scmp.ne.s32.totalorder %s73, %s75
    %p79 = scmp.eq.s32.totalorder %s18, 0
    %p80 = por %p78, %p79
    %p81 = scmp.ne.s32.totalorder %s73, %s75
    %p82 = scmp.eq.s32.totalorder %s23, 1
    %p83 = por %p81, %p82
    %p84 = scmp.ne.s32.totalorder %s75, %s76
    %p85 = scmp.eq.s32.totalorder %s23, 0
    %p86 = por %p84, %p85
    %p87 = scmp.ne.s32.totalorder %s75, %s76
    %p88 = scmp.eq.s32.totalorder %s24, 1
    %p89 = por %p87, %p88
    %p91 = scmp.ne.s32.totalorder %s76, %s90
    %p92 = scmp.eq.s32.totalorder %s24, 0
    %p93 = por %p91, %p92
    %s95 = sadd.s32 %s94, 1
    %p98 = scmp.eq.s32.totalorder %s18, 1
    %p99 = scmp.ne.s32.totalorder %s94, %s96
    %p100 = scmp.eq.s32.totalorder %s18, 0
    %p101 = por %p99, %p100
    %p102 = scmp.ne.s32.totalorder %s94, %s96
    %p103 = scmp.eq.s32.totalorder %s23, 1
    %p104 = por %p102, %p103
    %p105 = scmp.ne.s32.totalorder %s96, %s97
    %p106 = scmp.eq.s32.totalorder %s23, 0
    %p107 = por %p105, %p106
    %p108 = scmp.ne.s32.totalorder %s96, %s97
    %p109 = scmp.eq.s32.totalorder %s24, 1
    %p110 = por %p108, %p109
    %p112 = scmp.ne.s32.totalorder %s97, %s111
    %p113 = scmp.eq.s32.totalorder %s24, 0
    %p114 = por %p112, %p113
    %s116 = sadd.s32 %s115, 1
    %p119 = scmp.eq.s32.totalorder %s18, 1
    %p120 = scmp.ne.s32.totalorder %s115, %s117
    %p121 = scmp.eq.s32.totalorder %s18, 0
    %p122 = por %p120, %p121
    %p123 = scmp.ne.s32.totalorder %s115, %s117
    %p124 = scmp.eq.s32.totalorder %s23, 1
    %p125 = por %p123, %p124
    %p126 = scmp.ne.s32.totalorder %s117, %s118
    %p127 = scmp.eq.s32.totalorder %s23, 0
    %p128 = por %p126, %p127
    %p129 = scmp.ne.s32.totalorder %s117, %s118
    %p130 = scmp.eq.s32.totalorder %s24, 1
    %p131 = por %p129, %p130
    %p133 = scmp.ne.s32.totalorder %s118, %s132
    %p134 = scmp.eq.s32.totalorder %s24, 0
    %p135 = por %p133, %p134
    %s137 = sadd.s32 %s136, 1
    %p140 = scmp.eq.s32.totalorder %s18, 1
    %p141 = scmp.ne.s32.totalorder %s136, %s138
    %p142 = scmp.eq.s32.totalorder %s18, 0
    %p143 = por %p141, %p142
    %p144 = scmp.ne.s32.totalorder %s136, %s138
    %p145 = scmp.eq.s32.totalorder %s23, 1
    %p146 = por %p144, %p145
    %p147 = scmp.ne.s32.totalorder %s138, %s139
    %p148 = scmp.eq.s32.totalorder %s23, 0
    %p149 = por %p147, %p148
    %p150 = scmp.ne.s32.totalorder %s138, %s139
    %p151 = scmp.eq.s32.totalorder %s24, 1
    %p152 = por %p150, %p151
    %p154 = scmp.ne.s32.totalorder %s139, %s153
    %p155 = scmp.eq.s32.totalorder %s24, 0
    %p156 = por %p154, %p155
    %s158 = sadd.s32 %s157, 1
    %p161 = scmp.eq.s32.totalorder %s18, 1
    %p162 = scmp.ne.s32.totalorder %s157, %s159
    %p163 = scmp.eq.s32.totalorder %s18, 0
    %p164 = por %p162, %p163
    %p165 = scmp.ne.s32.totalorder %s157, %s159
    %p166 = scmp.eq.s32.totalorder %s23, 1
    %p167 = por %p165, %p166
    %p168 = scmp.ne.s32.totalorder %s159, %s160
    %p169 = scmp.eq.s32.totalorder %s23, 0
    %p170 = por %p168, %p169
    %p171 = scmp.ne.s32.totalorder %s159, %s160
    %p172 = scmp.eq.s32.totalorder %s24, 1
    %p173 = por %p171, %p172
    %p175 = scmp.ne.s32.totalorder %s160, %s174
    %p176 = scmp.eq.s32.totalorder %s24, 0
    %p177 = por %p175, %p176
    %s179 = sadd.s32 %s178, 1
    %p182 = scmp.eq.s32.totalorder %s18, 1
    %p183 = scmp.ne.s32.totalorder %s178, %s180
    %p184 = scmp.eq.s32.totalorder %s18, 0
    %p185 = por %p183, %p184
    %p186 = scmp.ne.s32.totalorder %s178, %s180
    %p187 = scmp.eq.s32.totalorder %s23, 1
    %p188 = por %p186, %p187
    %p189 = scmp.ne.s32.totalorder %s180, %s181
    %p190 = scmp.eq.s32.totalorder %s23, 0
    %p191 = por %p189, %p190
    %p192 = scmp.ne.s32.totalorder %s180, %s181
    %p193 = scmp.eq.s32.totalorder %s24, 1
    %p194 = por %p192, %p193
    %p196 = scmp.ne.s32.totalorder %s181, %s195
    %p197 = scmp.eq.s32.totalorder %s24, 0
    %p198 = por %p196, %p197
    %s200 = sadd.s32 %s199, 1
    %p203 = scmp.eq.s32.totalorder %s18, 1
    %p204 = scmp.ne.s32.totalorder %s199, %s201
    %p205 = scmp.eq.s32.totalorder %s18, 0
    %p206 = por %p204, %p205
    %p207 = scmp.ne.s32.totalorder %s199, %s201
    %p208 = scmp.eq.s32.totalorder %s23, 1
    %p209 = por %p207, %p208
    %p210 = scmp.ne.s32.totalorder %s201, %s202
    %p211 = scmp.eq.s32.totalorder %s23, 0
    %p212 = por %p210, %p211
    %p213 = scmp.ne.s32.totalorder %s201, %s202
    %p214 = scmp.eq.s32.totalorder %s24, 1
    %p215 = por %p213, %p214
    %p217 = scmp.ne.s32.totalorder %s202, %s216
    %p218 = scmp.eq.s32.totalorder %s24, 0
    %p219 = por %p217, %p218
    %s221 = sadd.s32 %s220, 1
    %p224 = scmp.eq.s32.totalorder %s18, 1
    %p225 = scmp.ne.s32.totalorder %s220, %s222
    %p226 = scmp.eq.s32.totalorder %s18, 0
    %p227 = por %p225, %p226
    %p228 = scmp.ne.s32.totalorder %s220, %s222
    %p229 = scmp.eq.s32.totalorder %s23, 1
    %p230 = por %p228, %p229
    %p231 = scmp.ne.s32.totalorder %s222, %s223
    %p232 = scmp.eq.s32.totalorder %s23, 0
    %p233 = por %p231, %p232
    %p234 = scmp.ne.s32.totalorder %s222, %s223
    %p235 = scmp.eq.s32.totalorder %s24, 1
    %p236 = por %p234, %p235
    %p238 = scmp.ne.s32.totalorder %s223, %s237
    %p239 = scmp.eq.s32.totalorder %s24, 0
    %p240 = por %p238, %p239
    %s242 = sadd.s32 %s241, 1
    %p245 = scmp.eq.s32.totalorder %s18, 1
    %p246 = scmp.ne.s32.totalorder %s241, %s243
    %p247 = scmp.eq.s32.totalorder %s18, 0
    %p248 = por %p246, %p247
    %p249 = scmp.ne.s32.totalorder %s241, %s243
    %p250 = scmp.eq.s32.totalorder %s23, 1
    %p251 = por %p249, %p250
    %p252 = scmp.ne.s32.totalorder %s243, %s244
    %p253 = scmp.eq.s32.totalorder %s23, 0
    %p254 = por %p252, %p253
    %p255 = scmp.ne.s32.totalorder %s243, %s244
    %p256 = scmp.eq.s32.totalorder %s24, 1
    %p257 = por %p255, %p256
    %p259 = scmp.ne.s32.totalorder %s244, %s258
    %p260 = scmp.eq.s32.totalorder %s24, 0
    %p261 = por %p259, %p260
    %s263 = sadd.s32 %s262, 1
    %p266 = scmp.eq.s32.totalorder %s18, 1
    %p267 = scmp.ne.s32.totalorder %s262, %s264
    %p268 = scmp.eq.s32.totalorder %s18, 0
    %p269 = por %p267, %p268
    %p270 = scmp.ne.s32.totalorder %s262, %s264
    %p271 = scmp.eq.s32.totalorder %s23, 1
    %p272 = por %p270, %p271
    %p273 = scmp.ne.s32.totalorder %s264, %s265
    %p274 = scmp.eq.s32.totalorder %s23, 0
    %p275 = por %p273, %p274
    %p276 = scmp.ne.s32.totalorder %s264, %s265
    %p277 = scmp.eq.s32.totalorder %s24, 1
    %p278 = por %p276, %p277
    %p280 = scmp.ne.s32.totalorder %s265, %s279
    %p281 = scmp.eq.s32.totalorder %s24, 0
    %p282 = por %p280, %p281
    %s283 = ssub.s32 %s18, %s25
    %p284 = scmp.eq.s32.totalorder %s283, 0
    %s286 = sadd.s32 %s285, 1
    %s287 = scalar_select %p284, %s285, %s286
    %p290 = pneg %p284
    %p291 = scmp.eq.s32.totalorder %s18, 1
    %p292 = por %p290, %p291
    %p293 = scmp.ne.s32.totalorder %s285, %s288
    %p294 = scmp.eq.s32.totalorder %s18, 0
    %p295 = por %p293, %p294
    %p296 = scmp.ne.s32.totalorder %s285, %s288
    %p297 = scmp.eq.s32.totalorder %s23, 1
    %p298 = por %p296, %p297
    %p299 = scmp.ne.s32.totalorder %s288, %s289
    %p300 = scmp.eq.s32.totalorder %s23, 0
    %p301 = por %p299, %p300
    %p302 = scmp.ne.s32.totalorder %s288, %s289
    %p303 = scmp.eq.s32.totalorder %s24, 1
    %p304 = por %p302, %p303
    %p306 = scmp.ne.s32.totalorder %s289, %s305
    %p307 = scmp.eq.s32.totalorder %s24, 0
    %p308 = por %p306, %p307
    %p309 = scmp.le.s32.totalorder 1, %s18
    %p310 = scmp.lt.s32.totalorder %s18, 3
    %p311 = pnand %p309, %p310
    %p312 = pneg %p311
    // Predicated region
    $region9: #{tpu_custom_call.1} parent=5 // pred_check
      _
    $region10: #{tpu_custom_call.1} parent=5 // pred_check_branch
      %314 = sbr.rel (%p311) target = $region12
    $region11: #{tpu_custom_call.1} parent=5 // pred_region
      %s315 = ssub.s32 %s18, 1
      // Predicated region
      $region13: #{tpu_custom_call.1} parent=11 // pred_check
        %p316 = pneg %p65
      $region14: #{tpu_custom_call.1} parent=11 // pred_check_branch
        %318 = sbr.rel (%p316) target = $region16
      $region15: #{tpu_custom_call.1} parent=11 // pred_region
        _
      $region16: #{tpu_custom_call.1} parent=11 // pred_fallthru
        _
      // Predicated region
      $region17: #{tpu_custom_call.1} parent=11 // pred_check
        %p319 = pneg %p86
      $region18: #{tpu_custom_call.1} parent=11 // pred_check_branch
        %321 = sbr.rel (%p319) target = $region20
      $region19: #{tpu_custom_call.1} parent=11 // pred_region
        _
      $region20: #{tpu_custom_call.1} parent=11 // pred_fallthru
        _
      // Predicated region
      $region21: #{tpu_custom_call.1} parent=11 // pred_check
        %p322 = pneg %p107
      $region22: #{tpu_custom_call.1} parent=11 // pred_check_branch
        %324 = sbr.rel (%p322) target = $region24
      $region23: #{tpu_custom_call.1} parent=11 // pred_region
        _
      $region24: #{tpu_custom_call.1} parent=11 // pred_fallthru
        _
      // Predicated region
      $region25: #{tpu_custom_call.1} parent=11 // pred_check
        %p325 = pneg %p128
      $region26: #{tpu_custom_call.1} parent=11 // pred_check_branch
        %327 = sbr.rel (%p325) target = $region28
      $region27: #{tpu_custom_call.1} parent=11 // pred_region
        _
      $region28: #{tpu_custom_call.1} parent=11 // pred_fallthru
        _
      // Predicated region
      $region29: #{tpu_custom_call.1} parent=11 // pred_check
        %p328 = pneg %p149
      $region30: #{tpu_custom_call.1} parent=11 // pred_check_branch
        %330 = sbr.rel (%p328) target = $region32
      $region31: #{tpu_custom_call.1} parent=11 // pred_region
        _
      $region32: #{tpu_custom_call.1} parent=11 // pred_fallthru
        _
      // Predicated region
      $region33: #{tpu_custom_call.1} parent=11 // pred_check
        %p331 = pneg %p170
      $region34: #{tpu_custom_call.1} parent=11 // pred_check_branch
        %333 = sbr.rel (%p331) target = $region36
      $region35: #{tpu_custom_call.1} parent=11 // pred_region
        _
      $region36: #{tpu_custom_call.1} parent=11 // pred_fallthru
        _
      // Predicated region
      $region37: #{tpu_custom_call.1} parent=11 // pred_check
        %p334 = pneg %p191
      $region38: #{tpu_custom_call.1} parent=11 // pred_check_branch
        %336 = sbr.rel (%p334) target = $region40
      $region39: #{tpu_custom_call.1} parent=11 // pred_region
        _
      $region40: #{tpu_custom_call.1} parent=11 // pred_fallthru
        _
      // Predicated region
      $region41: #{tpu_custom_call.1} parent=11 // pred_check
        %p337 = pneg %p212
      $region42: #{tpu_custom_call.1} parent=11 // pred_check_branch
        %339 = sbr.rel (%p337) target = $region44
      $region43: #{tpu_custom_call.1} parent=11 // pred_region
        _
      $region44: #{tpu_custom_call.1} parent=11 // pred_fallthru
        _
      // Predicated region
      $region45: #{tpu_custom_call.1} parent=11 // pred_check
        %p340 = pneg %p233
      $region46: #{tpu_custom_call.1} parent=11 // pred_check_branch
        %342 = sbr.rel (%p340) target = $region48
      $region47: #{tpu_custom_call.1} parent=11 // pred_region
        _
      $region48: #{tpu_custom_call.1} parent=11 // pred_fallthru
        _
      // Predicated region
      $region49: #{tpu_custom_call.1} parent=11 // pred_check
        %p343 = pneg %p254
      $region50: #{tpu_custom_call.1} parent=11 // pred_check_branch
        %345 = sbr.rel (%p343) target = $region52
      $region51: #{tpu_custom_call.1} parent=11 // pred_region
        _
      $region52: #{tpu_custom_call.1} parent=11 // pred_fallthru
        _
      // Predicated region
      $region53: #{tpu_custom_call.1} parent=11 // pred_check
        %p346 = pneg %p275
      $region54: #{tpu_custom_call.1} parent=11 // pred_check_branch
        %348 = sbr.rel (%p346) target = $region56
      $region55: #{tpu_custom_call.1} parent=11 // pred_region
        _
      $region56: #{tpu_custom_call.1} parent=11 // pred_fallthru
        _
    $region12: #{tpu_custom_call.1} parent=5 // pred_fallthru
      _
    %p349 = scmp.lt.s32.totalorder %s18, 2
    // Predicated region
    $region57: #{tpu_custom_call.1} parent=5 // pred_check
      %p350 = pneg %p349
    $region58: #{tpu_custom_call.1} parent=5 // pred_check_branch
      %352 = sbr.rel (%p350) target = $region60
    $region59: #{tpu_custom_call.1} parent=5 // pred_region
      // Predicated region
      $region61: #{tpu_custom_call.1} parent=59 // pred_check
        %p353 = pneg %p38
      $region62: #{tpu_custom_call.1} parent=59 // pred_check_branch
        %355 = sbr.rel (%p353) target = $region64
      $region63: #{tpu_custom_call.1} parent=59 // pred_region
        %p356 = scmp.lt.s32.totalorder %s18, 1
        %s357 = scalar_select %p356, %s18, 1
        %s358 = smul.addr %s357, 8
        %s359 = smul.addr %s358, 8
        %s360 = scalar_lea.vmem %s0, %s359
      $region64: #{tpu_custom_call.1} parent=59 // pred_fallthru
        _
    $region60: #{tpu_custom_call.1} parent=5 // pred_fallthru
      _
    %p361 = scmp.le.s32.totalorder 1, %s18
    %p362 = scmp.lt.s32.totalorder %s18, 3
    %p363 = pnand %p361, %p362
    %p364 = pneg %p363
    // Predicated region
    $region65: #{tpu_custom_call.1} parent=5 // pred_check
      _
    $region66: #{tpu_custom_call.1} parent=5 // pred_check_branch
      %366 = sbr.rel (%p363) target = $region68
    $region67: #{tpu_custom_call.1} parent=5 // pred_region
      %s367 = ssub.s32 %s18, 1
      %p368 = scmp.lt.s32.totalorder %s23, 1
      %s369 = scalar_select %p368, %s23, 1
      %s370 = smul.addr %s369, 8
      %s371 = smul.addr %s370, 8
      %s372 = scalar_lea.vmem %s0, %s371
      %p373 = pneg %p44
      %p374 = pneg %p41
      %p375 = pneg %p65
      %p376 = pneg %p62
      %p377 = pneg %p86
      %p378 = pneg %p83
      %p379 = pneg %p107
      %p380 = pneg %p104
      %p381 = pneg %p128
      %p382 = pneg %p125
      %p383 = pneg %p149
      %p384 = pneg %p146
      %p385 = pneg %p170
      %p386 = pneg %p167
      %p387 = pneg %p191
      %p388 = pneg %p188
      %p389 = pneg %p212
      %p390 = pneg %p209
      %p391 = pneg %p233
      %p392 = pneg %p230
      %p393 = pneg %p254
      %p394 = pneg %p251
      %p395 = pneg %p275
      %p396 = pneg %p272
      %p397 = pneg %p301
      %p398 = pneg %p298
      %p399 = scmp.lt.s32.totalorder %s23, 1
      %s400 = scalar_select %p399, %s23, 1
      %s401 = smul.addr %s400, 8
      %s402 = smul.addr %s401, 8
      %s403 = scalar_lea.vmem %s12, %s402
      %p404 = scmp.lt.s32.totalorder %s23, 1
      %s405 = scalar_select %p404, %s23, 1
      %s406 = smul.addr %s405, 8
      %s407 = smul.addr %s406, 8
      %s408 = scalar_lea.vmem %s0, %s407
      %p409 = scmp.lt.s32.totalorder %s23, 1
      %s410 = scalar_select %p409, %s23, 1
      %s411 = smul.addr %s410, 8
      %s412 = smul.addr %s411, 8
      %s413 = scalar_lea.vmem %s12, %s412
      %v414 = vld [vmem:[%s408] sm:$0xff]
      %v415 = vld [vmem:[%s408 + $0x8] sm:$0xff]
      %v416 = vld [vmem:[%s408 + $0x10] sm:$0xff]
      %v417 = vld [vmem:[%s408 + $0x18] sm:$0xff]
      %v418 = vld [vmem:[%s408 + $0x20] sm:$0xff]
      %v419 = vld [vmem:[%s408 + $0x28] sm:$0xff]
      %v420 = vld [vmem:[%s408 + $0x30] sm:$0xff]
      %v421 = vld [vmem:[%s408 + $0x38] sm:$0xff]
      %vm422 = vcmask 261120
      %v423 = vsel %vm422, %v414, 0.0
      %424 = vadd.xlane.f32.xlu0 %v423
      %v425 = vpop.xlane.xlu0 %424
      %v426 = vsel %vm422, %v415, 0.0
      %427 = vadd.xlane.f32.xlu0 %v426
      %v428 = vpop.xlane.xlu0 %427
      %v429 = vsel %vm422, %v416, 0.0
      %430 = vadd.xlane.f32.xlu0 %v429
      %v431 = vpop.xlane.xlu0 %430
      %v432 = vsel %vm422, %v417, 0.0
      %433 = vadd.xlane.f32.xlu0 %v432
      %v434 = vpop.xlane.xlu0 %433
      %v435 = vsel %vm422, %v418, 0.0
      %436 = vadd.xlane.f32.xlu0 %v435
      %v437 = vpop.xlane.xlu0 %436
      %v438 = vsel %vm422, %v419, 0.0
      %439 = vadd.xlane.f32.xlu0 %v438
      %v440 = vpop.xlane.xlu0 %439
      %v441 = vsel %vm422, %v420, 0.0
      %442 = vadd.xlane.f32.xlu0 %v441
      %v443 = vpop.xlane.xlu0 %442
      %v444 = vsel %vm422, %v421, 0.0
      %445 = vadd.xlane.f32.xlu0 %v444
      %v446 = vpop.xlane.xlu0 %445
      %v447 = vrcp.pop 32.0
      %v448 = vmul.f32 %v425, %v447
      %v449 = vmul.f32 %v428, %v447
      %v450 = vmul.f32 %v431, %v447
      %v451 = vmul.f32 %v434, %v447
      %v452 = vmul.f32 %v437, %v447
      %v453 = vmul.f32 %v440, %v447
      %v454 = vmul.f32 %v443, %v447
      %v455 = vmul.f32 %v446, %v447
      %v456 = vsub.f32 %v414, %v448
      %v457 = vsub.f32 %v415, %v449
      %v458 = vsub.f32 %v416, %v450
      %v459 = vsub.f32 %v417, %v451
      %v460 = vsub.f32 %v418, %v452
      %v461 = vsub.f32 %v419, %v453
      %v462 = vsub.f32 %v420, %v454
      %v463 = vsub.f32 %v421, %v455
      %v464 = vmul.f32 %v456, %v456
      %v465 = vmul.f32 %v457, %v457
      %v466 = vmul.f32 %v458, %v458
      %v467 = vmul.f32 %v459, %v459
      %v468 = vmul.f32 %v460, %v460
      %v469 = vmul.f32 %v461, %v461
      %v470 = vmul.f32 %v462, %v462
      %v471 = vmul.f32 %v463, %v463
      %v472 = vsel %vm422, %v464, 0.0
      %473 = vadd.xlane.f32.xlu0 %v472
      %v474 = vpop.xlane.xlu0 %473
      %v475 = vsel %vm422, %v465, 0.0
      %476 = vadd.xlane.f32.xlu0 %v475
      %v477 = vpop.xlane.xlu0 %476
      %v478 = vsel %vm422, %v466, 0.0
      %479 = vadd.xlane.f32.xlu0 %v478
      %v480 = vpop.xlane.xlu0 %479
      %v481 = vsel %vm422, %v467, 0.0
      %482 = vadd.xlane.f32.xlu0 %v481
      %v483 = vpop.xlane.xlu0 %482
      %v484 = vsel %vm422, %v468, 0.0
      %485 = vadd.xlane.f32.xlu0 %v484
      %v486 = vpop.xlane.xlu0 %485
      %v487 = vsel %vm422, %v469, 0.0
      %488 = vadd.xlane.f32.xlu0 %v487
      %v489 = vpop.xlane.xlu0 %488
      %v490 = vsel %vm422, %v470, 0.0
      %491 = vadd.xlane.f32.xlu0 %v490
      %v492 = vpop.xlane.xlu0 %491
      %v493 = vsel %vm422, %v471, 0.0
      %494 = vadd.xlane.f32.xlu0 %v493
      %v495 = vpop.xlane.xlu0 %494
      %v496 = vmul.f32 %v474, %v447
      %v497 = vmul.f32 %v477, %v447
      %v498 = vmul.f32 %v480, %v447
      %v499 = vmul.f32 %v483, %v447
      %v500 = vmul.f32 %v486, %v447
      %v501 = vmul.f32 %v489, %v447
      %v502 = vmul.f32 %v492, %v447
      %v503 = vmul.f32 %v495, %v447
      %v504 = vadd.f32 %v496, 1e-05
      %v505 = vadd.f32 %v497, 1e-05
      %v506 = vadd.f32 %v498, 1e-05
      %v507 = vadd.f32 %v499, 1e-05
      %v508 = vadd.f32 %v500, 1e-05
      %v509 = vadd.f32 %v501, 1e-05
      %v510 = vadd.f32 %v502, 1e-05
      %v511 = vadd.f32 %v503, 1e-05
      %v512 = vrsqrt.pop %v504
      %v513 = vrsqrt.pop %v505
      %v514 = vrsqrt.pop %v506
      %v515 = vrsqrt.pop %v507
      %v516 = vrsqrt.pop %v508
      %v517 = vrsqrt.pop %v509
      %v518 = vrsqrt.pop %v510
      %v519 = vrsqrt.pop %v511
      %v520 = vmul.f32 %v456, %v512
      %v521 = vmul.f32 %v457, %v513
      %v522 = vmul.f32 %v458, %v514
      %v523 = vmul.f32 %v459, %v515
      %v524 = vmul.f32 %v460, %v516
      %v525 = vmul.f32 %v461, %v517
      %v526 = vmul.f32 %v462, %v518
      %v527 = vmul.f32 %v463, %v519
      %v528 = vld [vmem:[%s1] sm:$0x1]
      %v530 = vlaneseq
      %v531 = vshrl.u32 %v530, 7
      %v532 = vsub.s32 0, %v531
      %v533 = vrot.slane %v528, %v532
      %v535 = vmul.f32 %v520, %v533
      %v536 = vmul.f32 %v521, %v533
      %v537 = vmul.f32 %v522, %v533
      %v538 = vmul.f32 %v523, %v533
      %v539 = vmul.f32 %v524, %v533
      %v540 = vmul.f32 %v525, %v533
      %v541 = vmul.f32 %v526, %v533
      %v542 = vmul.f32 %v527, %v533
      %v543 = vld [vmem:[%s2] sm:$0x1]
      %v545 = vlaneseq
      %v546 = vshrl.u32 %v545, 7
      %v547 = vsub.s32 0, %v546
      %v548 = vrot.slane %v543, %v547
      %v550 = vadd.f32 %v535, %v548
      %v551 = vadd.f32 %v536, %v548
      %v552 = vadd.f32 %v537, %v548
      %v553 = vadd.f32 %v538, %v548
      %v554 = vadd.f32 %v539, %v548
      %v555 = vadd.f32 %v540, %v548
      %v556 = vadd.f32 %v541, %v548
      %v557 = vadd.f32 %v542, %v548
      %v558 = vld [vmem:[%s3] sm:$0xff]
      %v559 = vld [vmem:[%s3 + $0x8] sm:$0xff]
      %v560 = vld [vmem:[%s3 + $0x10] sm:$0xff]
      %v561 = vld [vmem:[%s3 + $0x18] sm:$0xff]
      %v563 = vsel %vm422, %v550, 0
      %v566 = vsel %vm422, %v551, 0
      %v569 = vsel %vm422, %v552, 0
      %v572 = vsel %vm422, %v553, 0
      %v575 = vsel %vm422, %v554, 0
      %v578 = vsel %vm422, %v555, 0
      %v581 = vsel %vm422, %v556, 0
      %v584 = vsel %vm422, %v557, 0
      %586 = vmatprep.subr.mxu0 0.0
      %587 = vmatpush1.msra.mxu0 %v558
      %588 = vmatprep.subr.mxu0 0.0
      %589 = vmatpush1.msra.mxu0 %v559
      %590 = vmatprep.subr.mxu0 0.0
      %591 = vmatpush1.msra.mxu0 %v560
      %592 = vmatprep.subr.mxu0 0.0
      %593 = vmatpush1.msra.mxu0 %v561
      %594 = vmatprep.subr.mxu0 0.0
      %595 = vmatpush1.msra.mxu0 0.0
      %596 = vmatprep.subr.mxu0 0.0
      %597 = vmatpush1.msra.mxu0 0.0
      %598 = vmatprep.subr.mxu0 0.0
      %599 = vmatpush1.msra.mxu0 0.0
      %600 = vmatprep.subr.mxu0 0.0
      %601 = vmatpush1.msra.mxu0 0.0
      %602 = vmatprep.subr.mxu0 0.0
      %603 = vmatpush1.msra.mxu0 0.0
      %604 = vmatprep.subr.mxu0 0.0
      %605 = vmatpush1.msra.mxu0 0.0
      %606 = vmatprep.subr.mxu0 0.0
      %607 = vmatpush1.msra.mxu0 0.0
      %608 = vmatprep.subr.mxu0 0.0
      %609 = vmatpush1.msra.mxu0 0.0
      %610 = vmatprep.subr.mxu0 0.0
      %611 = vmatpush1.msra.mxu0 0.0
      %612 = vmatprep.subr.mxu0 0.0
      %613 = vmatpush1.msra.mxu0 0.0
      %614 = vmatprep.subr.mxu0 0.0
      %615 = vmatpush1.msra.mxu0 0.0
      %616 = vmatprep.subr.mxu0 0.0
      %617 = vmatpush1.msra.mxu0 0.0
      %618 = vmatprep.subr.mxu0 0.0
      %619 = vmatpush1.msra.mxu0 0.0
      %620 = vmatprep.subr.mxu0 0.0
      %621 = vmatpush1.msra.mxu0 0.0
      %622 = vmatprep.subr.mxu0 0.0
      %623 = vmatpush1.msra.mxu0 0.0
      %624 = vmatprep.subr.mxu0 0.0
      %625 = vmatpush1.msra.mxu0 0.0
      %626 = vmatprep.subr.mxu0 0.0
      %627 = vmatpush1.msra.mxu0 0.0
      %628 = vmatprep.subr.mxu0 0.0
      %629 = vmatpush1.msra.mxu0 0.0
      %630 = vmatprep.subr.mxu0 0.0
      %631 = vmatpush1.msra.mxu0 0.0
      %632 = vmatprep.subr.mxu0 0.0
      %633 = vmatpush1.msra.mxu0 0.0
      %634 = vmatprep.subr.mxu0 0.0
      %635 = vmatpush1.msra.mxu0 0.0
      %636 = vmatprep.subr.mxu0 0.0
      %637 = vmatpush1.msra.mxu0 0.0
      %638 = vmatprep.subr.mxu0 0.0
      %639 = vmatpush1.msra.mxu0 0.0
      %640 = vmatprep.subr.mxu0 0.0
      %641 = vmatpush1.msra.mxu0 0.0
      %642 = vmatprep.subr.mxu0 0.0
      %643 = vmatpush1.msra.mxu0 0.0
      %644 = vmatprep.subr.mxu0 0.0
      %645 = vmatpush1.msra.mxu0 0.0
      %646 = vmatprep.subr.mxu0 0.0
      %647 = vmatpush1.msra.mxu0 0.0
      %648 = vmatprep.subr.mxu0 0.0
      %649 = vmatpush1.msra.mxu0 0.0
      %650 = vmatprep.mubr.f32.mxu0 0.0
      %651 = vmatmul.mubr.f32.gmra.mrb[0].mxu0 %v563
      %v652 = vpop.f32.mrb[0].mxu0
      %v653 = vadd.f32 0.0, %v652
      %v654 = vpop.f32.mrb[0].mxu0
      %655 = vmatprep.mubr.f32.mxu0 0.0
      %656 = vmatmul.mubr.f32.gmra.mrb[0].mxu0 %v566
      %v657 = vpop.f32.mrb[0].mxu0
      %v658 = vadd.f32 0.0, %v657
      %v659 = vpop.f32.mrb[0].mxu0
      %660 = vmatprep.mubr.f32.mxu0 0.0
      %661 = vmatmul.mubr.f32.gmra.mrb[0].mxu0 %v569
      %v662 = vpop.f32.mrb[0].mxu0
      %v663 = vadd.f32 0.0, %v662
      %v664 = vpop.f32.mrb[0].mxu0
      %665 = vmatprep.mubr.f32.mxu0 0.0
      %666 = vmatmul.mubr.f32.gmra.mrb[0].mxu0 %v572
      %v667 = vpop.f32.mrb[0].mxu0
      %v668 = vadd.f32 0.0, %v667
      %v669 = vpop.f32.mrb[0].mxu0
      %670 = vmatprep.mubr.f32.mxu0 0.0
      %671 = vmatmul.mubr.f32.gmra.mrb[0].mxu0 %v575
      %v672 = vpop.f32.mrb[0].mxu0
      %v673 = vadd.f32 0.0, %v672
      %v674 = vpop.f32.mrb[0].mxu0
      %675 = vmatprep.mubr.f32.mxu0 0.0
      %676 = vmatmul.mubr.f32.gmra.mrb[0].mxu0 %v578
      %v677 = vpop.f32.mrb[0].mxu0
      %v678 = vadd.f32 0.0, %v677
      %v679 = vpop.f32.mrb[0].mxu0
      %680 = vmatprep.mubr.f32.mxu0 0.0
      %681 = vmatmul.mubr.f32.gmra.mrb[0].mxu0 %v581
      %v682 = vpop.f32.mrb[0].mxu0
      %v683 = vadd.f32 0.0, %v682
      %v684 = vpop.f32.mrb[0].mxu0
      %685 = vmatprep.mubr.f32.mxu0 0.0
      %686 = vmatmul.mubr.f32.gmra.mrb[0].mxu0 %v584
      %v687 = vpop.f32.mrb[0].mxu0
      %v688 = vadd.f32 0.0, %v687
      %v689 = vpop.f32.mrb[0].mxu0
      %690 = vdwg.mxu0
      %699 = vrot.lane.b32.xlu0 %v653, 64
      %v700 = vpop.permute.xlu0 %699
      %701 = vrot.lane.b32.xlu0 %v658, 64
      %v702 = vpop.permute.xlu0 %701
      %703 = vrot.lane.b32.xlu0 %v663, 64
      %v704 = vpop.permute.xlu0 %703
      %705 = vrot.lane.b32.xlu0 %v668, 64
      %v706 = vpop.permute.xlu0 %705
      %707 = vrot.lane.b32.xlu0 %v673, 64
      %v708 = vpop.permute.xlu0 %707
      %709 = vrot.lane.b32.xlu0 %v678, 64
      %v710 = vpop.permute.xlu0 %709
      %711 = vrot.lane.b32.xlu0 %v683, 64
      %v712 = vpop.permute.xlu0 %711
      %713 = vrot.lane.b32.xlu0 %v688, 64
      %v714 = vpop.permute.xlu0 %713
      %vm723 = vcmask 523264
      %724 = vst.msk [vmem:[#allocation6] sm:$0xff] %vm723, %v700
      %725 = vst.msk [vmem:[#allocation6 + $0x8] sm:$0xff] %vm723, %v702
      %726 = vst.msk [vmem:[#allocation6 + $0x10] sm:$0xff] %vm723, %v704
      %727 = vst.msk [vmem:[#allocation6 + $0x18] sm:$0xff] %vm723, %v706
      %728 = vst.msk [vmem:[#allocation6 + $0x20] sm:$0xff] %vm723, %v708
      %729 = vst.msk [vmem:[#allocation6 + $0x28] sm:$0xff] %vm723, %v710
      %730 = vst.msk [vmem:[#allocation6 + $0x30] sm:$0xff] %vm723, %v712
      %731 = vst.msk [vmem:[#allocation6 + $0x38] sm:$0xff] %vm723, %v714
      %732 = vst.msk [vmem:[#allocation2] sm:$0xff] %vm723, 0.0
      %733 = vst.msk [vmem:[#allocation2 + $0x8] sm:$0xff] %vm723, %v653
      %734 = vst.msk [vmem:[#allocation2 + $0x10] sm:$0xff] %vm723, %v658
      %735 = vst.msk [vmem:[#allocation2 + $0x18] sm:$0xff] %vm723, %v663
      %736 = vst.msk [vmem:[#allocation2 + $0x20] sm:$0xff] %vm723, %v668
      %737 = vst.msk [vmem:[#allocation2 + $0x28] sm:$0xff] %vm723, %v673
      %738 = vst.msk [vmem:[#allocation2 + $0x30] sm:$0xff] %vm723, %v678
      %739 = vst.msk [vmem:[#allocation2 + $0x38] sm:$0xff] %vm723, %v683
      %740 = vst.msk [vmem:[#allocation2 + $0x40] sm:$0xff] %vm723, %v688
      %v741 = vld [vmem:[#allocation2 + $0x5] sm:$0xff]
      %v742 = vld [vmem:[#allocation2 + $0xd] sm:$0xff]
      %v743 = vld [vmem:[#allocation2 + $0x15] sm:$0xff]
      %v744 = vld [vmem:[#allocation2 + $0x1d] sm:$0xff]
      %v745 = vld [vmem:[#allocation2 + $0x25] sm:$0xff]
      %v746 = vld [vmem:[#allocation2 + $0x2d] sm:$0xff]
      %v747 = vld [vmem:[#allocation2 + $0x35] sm:$0xff]
      %v748 = vld [vmem:[#allocation2 + $0x3d] sm:$0xff]
      %v749 = vld [vmem:[%s4] sm:$0x1]
      %v750 = vlaneseq
      %v751 = vshrl.u32 %v750, 7
      %v752 = vsub.s32 0, %v751
      %v753 = vrot.slane %v749, %v752
      %v754 = vmul.f32 %v741, %v753
      %v755 = vmul.f32 %v742, %v753
      %v756 = vmul.f32 %v743, %v753
      %v757 = vmul.f32 %v744, %v753
      %v758 = vmul.f32 %v745, %v753
      %v759 = vmul.f32 %v746, %v753
      %v760 = vmul.f32 %v747, %v753
      %v761 = vmul.f32 %v748, %v753
      %v762 = vld [vmem:[#allocation2 + $0x6] sm:$0xff]
      %v763 = vld [vmem:[#allocation2 + $0xe] sm:$0xff]
      %v764 = vld [vmem:[#allocation2 + $0x16] sm:$0xff]
      %v765 = vld [vmem:[#allocation2 + $0x1e] sm:$0xff]
      %v766 = vld [vmem:[#allocation2 + $0x26] sm:$0xff]
      %v767 = vld [vmem:[#allocation2 + $0x2e] sm:$0xff]
      %v768 = vld [vmem:[#allocation2 + $0x36] sm:$0xff]
      %v769 = vld [vmem:[#allocation2 + $0x3e] sm:$0xff]
      %v770 = vld [vmem:[%s4 + $0x1] sm:$0x1]
      %v771 = vlaneseq
      %v772 = vshrl.u32 %v771, 7
      %v773 = vsub.s32 0, %v772
      %v774 = vrot.slane %v770, %v773
      %v775 = vmul.f32 %v762, %v774
      %v776 = vmul.f32 %v763, %v774
      %v777 = vmul.f32 %v764, %v774
      %v778 = vmul.f32 %v765, %v774
      %v779 = vmul.f32 %v766, %v774
      %v780 = vmul.f32 %v767, %v774
      %v781 = vmul.f32 %v768, %v774
      %v782 = vmul.f32 %v769, %v774
      %v783 = vadd.f32 %v754, %v775
      %v784 = vadd.f32 %v755, %v776
      %v785 = vadd.f32 %v756, %v777
      %v786 = vadd.f32 %v757, %v778
      %v787 = vadd.f32 %v758, %v779
      %v788 = vadd.f32 %v759, %v780
      %v789 = vadd.f32 %v760, %v781
      %v790 = vadd.f32 %v761, %v782
      %v791 = vld [vmem:[#allocation2 + $0x7] sm:$0xff]
      %v792 = vld [vmem:[#allocation2 + $0xf] sm:$0xff]
      %v793 = vld [vmem:[#allocation2 + $0x17] sm:$0xff]
      %v794 = vld [vmem:[#allocation2 + $0x1f] sm:$0xff]
      %v795 = vld [vmem:[#allocation2 + $0x27] sm:$0xff]
      %v796 = vld [vmem:[#allocation2 + $0x2f] sm:$0xff]
      %v797 = vld [vmem:[#allocation2 + $0x37] sm:$0xff]
      %v798 = vld [vmem:[#allocation2 + $0x3f] sm:$0xff]
      %v799 = vld [vmem:[%s4 + $0x2] sm:$0x1]
      %v800 = vlaneseq
      %v801 = vshrl.u32 %v800, 7
      %v802 = vsub.s32 0, %v801
      %v803 = vrot.slane %v799, %v802
      %v804 = vmul.f32 %v791, %v803
      %v805 = vmul.f32 %v792, %v803
      %v806 = vmul.f32 %v793, %v803
      %v807 = vmul.f32 %v794, %v803
      %v808 = vmul.f32 %v795, %v803
      %v809 = vmul.f32 %v796, %v803
      %v810 = vmul.f32 %v797, %v803
      %v811 = vmul.f32 %v798, %v803
      %v812 = vadd.f32 %v783, %v804
      %v813 = vadd.f32 %v784, %v805
      %v814 = vadd.f32 %v785, %v806
      %v815 = vadd.f32 %v786, %v807
      %v816 = vadd.f32 %v787, %v808
      %v817 = vadd.f32 %v788, %v809
      %v818 = vadd.f32 %v789, %v810
      %v819 = vadd.f32 %v790, %v811
      %v820 = vld [vmem:[#allocation2 + $0x8] sm:$0xff]
      %v821 = vld [vmem:[#allocation2 + $0x10] sm:$0xff]
      %v822 = vld [vmem:[#allocation2 + $0x18] sm:$0xff]
      %v823 = vld [vmem:[#allocation2 + $0x20] sm:$0xff]
      %v824 = vld [vmem:[#allocation2 + $0x28] sm:$0xff]
      %v825 = vld [vmem:[#allocation2 + $0x30] sm:$0xff]
      %v826 = vld [vmem:[#allocation2 + $0x38] sm:$0xff]
      %v827 = vld [vmem:[#allocation2 + $0x40] sm:$0xff]
      %v828 = vld [vmem:[%s4 + $0x3] sm:$0x1]
      %v829 = vlaneseq
      %v830 = vshrl.u32 %v829, 7
      %v831 = vsub.s32 0, %v830
      %v832 = vrot.slane %v828, %v831
      %v833 = vmul.f32 %v820, %v832
      %v834 = vmul.f32 %v821, %v832
      %v835 = vmul.f32 %v822, %v832
      %v836 = vmul.f32 %v823, %v832
      %v837 = vmul.f32 %v824, %v832
      %v838 = vmul.f32 %v825, %v832
      %v839 = vmul.f32 %v826, %v832
      %v840 = vmul.f32 %v827, %v832
      %v841 = vadd.f32 %v812, %v833
      %v842 = vadd.f32 %v813, %v834
      %v843 = vadd.f32 %v814, %v835
      %v844 = vadd.f32 %v815, %v836
      %v845 = vadd.f32 %v816, %v837
      %v846 = vadd.f32 %v817, %v838
      %v847 = vadd.f32 %v818, %v839
      %v848 = vadd.f32 %v819, %v840
      %v849 = vld [vmem:[%s5] sm:$0x1]
      %v851 = vlaneseq
      %v852 = vshrl.u32 %v851, 7
      %v853 = vsub.s32 0, %v852
      %v854 = vrot.slane %v849, %v853
      %v856 = vadd.f32 %v841, %v854
      %v857 = vadd.f32 %v842, %v854
      %v858 = vadd.f32 %v843, %v854
      %v859 = vadd.f32 %v844, %v854
      %v860 = vadd.f32 %v845, %v854
      %v861 = vadd.f32 %v846, %v854
      %v862 = vadd.f32 %v847, %v854
      %v863 = vadd.f32 %v848, %v854
      %v864 = vxor.u32 %v856, 2147483648
      %v865 = vxor.u32 %v857, 2147483648
      %v866 = vxor.u32 %v858, 2147483648
      %v867 = vxor.u32 %v859, 2147483648
      %v868 = vxor.u32 %v860, 2147483648
      %v869 = vxor.u32 %v861, 2147483648
      %v870 = vxor.u32 %v862, 2147483648
      %v871 = vxor.u32 %v863, 2147483648
      %v872 = vmul.f32 %v864, 1.442695
      %v873 = vpow.pop %v872
      %v874 = vmul.f32 %v865, 1.442695
      %v875 = vpow.pop %v874
      %v876 = vmul.f32 %v866, 1.442695
      %v877 = vpow.pop %v876
      %v878 = vmul.f32 %v867, 1.442695
      %v879 = vpow.pop %v878
      %v880 = vmul.f32 %v868, 1.442695
      %v881 = vpow.pop %v880
      %v882 = vmul.f32 %v869, 1.442695
      %v883 = vpow.pop %v882
      %v884 = vmul.f32 %v870, 1.442695
      %v885 = vpow.pop %v884
      %v886 = vmul.f32 %v871, 1.442695
      %v887 = vpow.pop %v886
      %v888 = vadd.f32 %v873, 1.0
      %v889 = vadd.f32 %v875, 1.0
      %v890 = vadd.f32 %v877, 1.0
      %v891 = vadd.f32 %v879, 1.0
      %v892 = vadd.f32 %v881, 1.0
      %v893 = vadd.f32 %v883, 1.0
      %v894 = vadd.f32 %v885, 1.0
      %v895 = vadd.f32 %v887, 1.0
      %v896 = vrcp.pop %v888
      %v897 = vmul.f32 1.0, %v896
      %v898 = vrcp.pop %v889
      %v899 = vmul.f32 1.0, %v898
      %v900 = vrcp.pop %v890
      %v901 = vmul.f32 1.0, %v900
      %v902 = vrcp.pop %v891
      %v903 = vmul.f32 1.0, %v902
      %v904 = vrcp.pop %v892
      %v905 = vmul.f32 1.0, %v904
      %v906 = vrcp.pop %v893
      %v907 = vmul.f32 1.0, %v906
      %v908 = vrcp.pop %v894
      %v909 = vmul.f32 1.0, %v908
      %v910 = vrcp.pop %v895
      %v911 = vmul.f32 1.0, %v910
      %v912 = vmul.f32 %v856, %v897
      %v913 = vmul.f32 %v857, %v899
      %v914 = vmul.f32 %v858, %v901
      %v915 = vmul.f32 %v859, %v903
      %v916 = vmul.f32 %v860, %v905
      %v917 = vmul.f32 %v861, %v907
      %v918 = vmul.f32 %v862, %v909
      %v919 = vmul.f32 %v863, %v911
      %920 = vst.msk [vmem:[#allocation5] sm:$0xff] %vm723, %v912
      %921 = vst.msk [vmem:[#allocation5 + $0x8] sm:$0xff] %vm723, %v913
      %922 = vst.msk [vmem:[#allocation5 + $0x10] sm:$0xff] %vm723, %v914
      %923 = vst.msk [vmem:[#allocation5 + $0x18] sm:$0xff] %vm723, %v915
      %924 = vst.msk [vmem:[#allocation5 + $0x20] sm:$0xff] %vm723, %v916
      %925 = vst.msk [vmem:[#allocation5 + $0x28] sm:$0xff] %vm723, %v917
      %926 = vst.msk [vmem:[#allocation5 + $0x30] sm:$0xff] %vm723, %v918
      %927 = vst.msk [vmem:[#allocation5 + $0x38] sm:$0xff] %vm723, %v919
      %v928 = vld [vmem:[%s6] sm:$0xff]
      %v929 = vld [vmem:[%s6 + $0x8] sm:$0xff]
      %v930 = vld [vmem:[%s6 + $0x10] sm:$0xff]
      %v931 = vld [vmem:[%s6 + $0x18] sm:$0xff]
      %v932 = vld [vmem:[%s6 + $0x20] sm:$0xff]
      %v933 = vld [vmem:[%s6 + $0x28] sm:$0xff]
      %v934 = vld [vmem:[%s6 + $0x30] sm:$0xff]
      %v935 = vld [vmem:[%s6 + $0x38] sm:$0xff]
      %v937 = vsel %vm723, %v912, 0
      %v940 = vsel %vm723, %v913, 0
      %v943 = vsel %vm723, %v914, 0
      %v946 = vsel %vm723, %v915, 0
      %v949 = vsel %vm723, %v916, 0
      %v952 = vsel %vm723, %v917, 0
      %v955 = vsel %vm723, %v918, 0
      %v958 = vsel %vm723, %v919, 0
      %960 = vmatprep.subr.mxu0 0.0
      %961 = vmatpush1.msra.mxu0 %v928
      %962 = vmatprep.subr.mxu0 0.0
      %963 = vmatpush1.msra.mxu0 %v929
      %964 = vmatprep.subr.mxu0 0.0
      %965 = vmatpush1.msra.mxu0 %v930
      %966 = vmatprep.subr.mxu0 0.0
      %967 = vmatpush1.msra.mxu0 %v931
      %968 = vmatprep.subr.mxu0 0.0
      %969 = vmatpush1.msra.mxu0 %v932
      %970 = vmatprep.subr.mxu0 0.0
      %971 = vmatpush1.msra.mxu0 %v933
      %972 = vmatprep.subr.mxu0 0.0
      %973 = vmatpush1.msra.mxu0 %v934
      %974 = vmatprep.subr.mxu0 0.0
      %975 = vmatpush1.msra.mxu0 %v935
      %976 = vmatprep.subr.mxu0 0.0
      %977 = vmatpush1.msra.mxu0 0.0
      %978 = vmatprep.subr.mxu0 0.0
      %979 = vmatpush1.msra.mxu0 0.0
      %980 = vmatprep.subr.mxu0 0.0
      %981 = vmatpush1.msra.mxu0 0.0
      %982 = vmatprep.subr.mxu0 0.0
      %983 = vmatpush1.msra.mxu0 0.0
      %984 = vmatprep.subr.mxu0 0.0
      %985 = vmatpush1.msra.mxu0 0.0
      %986 = vmatprep.subr.mxu0 0.0
      %987 = vmatpush1.msra.mxu0 0.0
      %988 = vmatprep.subr.mxu0 0.0
      %989 = vmatpush1.msra.mxu0 0.0
      %990 = vmatprep.subr.mxu0 0.0
      %991 = vmatpush1.msra.mxu0 0.0
      %992 = vmatprep.subr.mxu0 0.0
      %993 = vmatpush1.msra.mxu0 0.0
      %994 = vmatprep.subr.mxu0 0.0
      %995 = vmatpush1.msra.mxu0 0.0
      %996 = vmatprep.subr.mxu0 0.0
      %997 = vmatpush1.msra.mxu0 0.0
      %998 = vmatprep.subr.mxu0 0.0
      %999 = vmatpush1.msra.mxu0 0.0
      %1000 = vmatprep.subr.mxu0 0.0
      %1001 = vmatpush1.msra.mxu0 0.0
      %1002 = vmatprep.subr.mxu0 0.0
      %1003 = vmatpush1.msra.mxu0 0.0
      %1004 = vmatprep.subr.mxu0 0.0
      %1005 = vmatpush1.msra.mxu0 0.0
      %1006 = vmatprep.subr.mxu0 0.0
      %1007 = vmatpush1.msra.mxu0 0.0
      %1008 = vmatprep.subr.mxu0 0.0
      %1009 = vmatpush1.msra.mxu0 0.0
      %1010 = vmatprep.subr.mxu0 0.0
      %1011 = vmatpush1.msra.mxu0 0.0
      %1012 = vmatprep.subr.mxu0 0.0
      %1013 = vmatpush1.msra.mxu0 0.0
      %1014 = vmatprep.subr.mxu0 0.0
      %1015 = vmatpush1.msra.mxu0 0.0
      %1016 = vmatprep.subr.mxu0 0.0
      %1017 = vmatpush1.msra.mxu0 0.0
      %1018 = vmatprep.subr.mxu0 0.0
      %1019 = vmatpush1.msra.mxu0 0.0
      %1020 = vmatprep.subr.mxu0 0.0
      %1021 = vmatpush1.msra.mxu0 0.0
      %1022 = vmatprep.subr.mxu0 0.0
      %1023 = vmatpush1.msra.mxu0 0.0
      %1024 = vmatprep.mubr.f32.mxu0 0.0
      %1025 = vmatmul.mubr.f32.gmra.mrb[0].mxu0 %v937
      %v1026 = vpop.f32.mrb[0].mxu0
      %v1027 = vadd.f32 0.0, %v1026
      %v1028 = vpop.f32.mrb[0].mxu0
      %1029 = vmatprep.mubr.f32.mxu0 0.0
      %1030 = vmatmul.mubr.f32.gmra.mrb[0].mxu0 %v940
      %v1031 = vpop.f32.mrb[0].mxu0
      %v1032 = vadd.f32 0.0, %v1031
      %v1033 = vpop.f32.mrb[0].mxu0
      %1034 = vmatprep.mubr.f32.mxu0 0.0
      %1035 = vmatmul.mubr.f32.gmra.mrb[0].mxu0 %v943
      %v1036 = vpop.f32.mrb[0].mxu0
      %v1037 = vadd.f32 0.0, %v1036
      %v1038 = vpop.f32.mrb[0].mxu0
      %1039 = vmatprep.mubr.f32.mxu0 0.0
      %1040 = vmatmul.mubr.f32.gmra.mrb[0].mxu0 %v946
      %v1041 = vpop.f32.mrb[0].mxu0
      %v1042 = vadd.f32 0.0, %v1041
      %v1043 = vpop.f32.mrb[0].mxu0
      %1044 = vmatprep.mubr.f32.mxu0 0.0
      %1045 = vmatmul.mubr.f32.gmra.mrb[0].mxu0 %v949
      %v1046 = vpop.f32.mrb[0].mxu0
      %v1047 = vadd.f32 0.0, %v1046
      %v1048 = vpop.f32.mrb[0].mxu0
      %1049 = vmatprep.mubr.f32.mxu0 0.0
      %1050 = vmatmul.mubr.f32.gmra.mrb[0].mxu0 %v952
      %v1051 = vpop.f32.mrb[0].mxu0
      %v1052 = vadd.f32 0.0, %v1051
      %v1053 = vpop.f32.mrb[0].mxu0
      %1054 = vmatprep.mubr.f32.mxu0 0.0
      %1055 = vmatmul.mubr.f32.gmra.mrb[0].mxu0 %v955
      %v1056 = vpop.f32.mrb[0].mxu0
      %v1057 = vadd.f32 0.0, %v1056
      %v1058 = vpop.f32.mrb[0].mxu0
      %1059 = vmatprep.mubr.f32.mxu0 0.0
      %1060 = vmatmul.mubr.f32.gmra.mrb[0].mxu0 %v958
      %v1061 = vpop.f32.mrb[0].mxu0
      %v1062 = vadd.f32 0.0, %v1061
      %v1063 = vpop.f32.mrb[0].mxu0
      %1064 = vdwg.mxu0
      %1065 = vst [vmem:[#allocation3] sm:$0xff] %v1027
      %1066 = vst [vmem:[#allocation3 + $0x8] sm:$0xff] %v1032
      %1067 = vst [vmem:[#allocation3 + $0x10] sm:$0xff] %v1037
      %1068 = vst [vmem:[#allocation3 + $0x18] sm:$0xff] %v1042
      %1069 = vst [vmem:[#allocation3 + $0x20] sm:$0xff] %v1047
      %1070 = vst [vmem:[#allocation3 + $0x28] sm:$0xff] %v1052
      %1071 = vst [vmem:[#allocation3 + $0x30] sm:$0xff] %v1057
      %1072 = vst [vmem:[#allocation3 + $0x38] sm:$0xff] %v1062
      %v1073 = vld [vmem:[%s7] sm:$0x1]
      %1075 = vset.pattern.permute.xlu0 32
      %1076 = vperm.xlu0 %1075, %v1027
      %v1077 = vpop.permute.xlu0 %1076
      %1080 = vset.pattern.permute.xlu0 32
      %1081 = vperm.xlu0 %1080, %v1032
      %v1082 = vpop.permute.xlu0 %1081
      %1085 = vset.pattern.permute.xlu0 32
      %1086 = vperm.xlu0 %1085, %v1037
      %v1087 = vpop.permute.xlu0 %1086
      %1090 = vset.pattern.permute.xlu0 32
      %1091 = vperm.xlu0 %1090, %v1042
      %v1092 = vpop.permute.xlu0 %1091
      %1095 = vset.pattern.permute.xlu0 32
      %1096 = vperm.xlu0 %1095, %v1047
      %v1097 = vpop.permute.xlu0 %1096
      %1100 = vset.pattern.permute.xlu0 32
      %1101 = vperm.xlu0 %1100, %v1052
      %v1102 = vpop.permute.xlu0 %1101
      %1105 = vset.pattern.permute.xlu0 32
      %1106 = vperm.xlu0 %1105, %v1057
      %v1107 = vpop.permute.xlu0 %1106
      %1110 = vset.pattern.permute.xlu0 32
      %1111 = vperm.xlu0 %1110, %v1062
      %v1112 = vpop.permute.xlu0 %1111
      %v1114 = vlaneseq
      %v1115 = vshrl.u32 %v1114, 7
      %v1116 = vsub.s32 0, %v1115
      %v1117 = vrot.slane %v1073, %v1116
      %v1118 = vmul.f32 %v1077, %v1117
      %v1119 = vmul.f32 %v1082, %v1117
      %v1120 = vmul.f32 %v1087, %v1117
      %v1121 = vmul.f32 %v1092, %v1117
      %v1122 = vmul.f32 %v1097, %v1117
      %v1123 = vmul.f32 %v1102, %v1117
      %v1124 = vmul.f32 %v1107, %v1117
      %v1125 = vmul.f32 %v1112, %v1117
      %v1126 = vld [vmem:[%s7 + $0x1] sm:$0x1]
      %1127 = vset.pattern.permute.xlu0 33
      %1128 = vperm.xlu0 %1127, %v1027
      %v1129 = vpop.permute.xlu0 %1128
      %1131 = vset.pattern.permute.xlu0 33
      %1132 = vperm.xlu0 %1131, %v1032
      %v1133 = vpop.permute.xlu0 %1132
      %1135 = vset.pattern.permute.xlu0 33
      %1136 = vperm.xlu0 %1135, %v1037
      %v1137 = vpop.permute.xlu0 %1136
      %1139 = vset.pattern.permute.xlu0 33
      %1140 = vperm.xlu0 %1139, %v1042
      %v1141 = vpop.permute.xlu0 %1140
      %1143 = vset.pattern.permute.xlu0 33
      %1144 = vperm.xlu0 %1143, %v1047
      %v1145 = vpop.permute.xlu0 %1144
      %1147 = vset.pattern.permute.xlu0 33
      %1148 = vperm.xlu0 %1147, %v1052
      %v1149 = vpop.permute.xlu0 %1148
      %1151 = vset.pattern.permute.xlu0 33
      %1152 = vperm.xlu0 %1151, %v1057
      %v1153 = vpop.permute.xlu0 %1152
      %1155 = vset.pattern.permute.xlu0 33
      %1156 = vperm.xlu0 %1155, %v1062
      %v1157 = vpop.permute.xlu0 %1156
      %v1159 = vlaneseq
      %v1160 = vshrl.u32 %v1159, 7
      %v1161 = vsub.s32 0, %v1160
      %v1162 = vrot.slane %v1126, %v1161
      %v1163 = vmul.f32 %v1129, %v1162
      %v1164 = vmul.f32 %v1133, %v1162
      %v1165 = vmul.f32 %v1137, %v1162
      %v1166 = vmul.f32 %v1141, %v1162
      %v1167 = vmul.f32 %v1145, %v1162
      %v1168 = vmul.f32 %v1149, %v1162
      %v1169 = vmul.f32 %v1153, %v1162
      %v1170 = vmul.f32 %v1157, %v1162
      %v1171 = vadd.f32 %v1118, %v1163
      %v1172 = vadd.f32 %v1119, %v1164
      %v1173 = vadd.f32 %v1120, %v1165
      %v1174 = vadd.f32 %v1121, %v1166
      %v1175 = vadd.f32 %v1122, %v1167
      %v1176 = vadd.f32 %v1123, %v1168
      %v1177 = vadd.f32 %v1124, %v1169
      %v1178 = vadd.f32 %v1125, %v1170
      %v1179 = vld [vmem:[%s8] sm:$0x1]
      %v1181 = vlaneseq
      %v1182 = vshrl.u32 %v1181, 7
      %v1183 = vsub.s32 0, %v1182
      %v1184 = vrot.slane %v1179, %v1183
      %v1186 = vadd.f32 %v1171, %v1184
      %v1187 = vadd.f32 %v1172, %v1184
      %v1188 = vadd.f32 %v1173, %v1184
      %v1189 = vadd.f32 %v1174, %v1184
      %v1190 = vadd.f32 %v1175, %v1184
      %v1191 = vadd.f32 %v1176, %v1184
      %v1192 = vadd.f32 %v1177, %v1184
      %v1193 = vadd.f32 %v1178, %v1184
      %vm1194 = vcmp.gt.f32.partialorder %v1186, 20.0
      %vm1195 = vcmp.gt.f32.partialorder %v1187, 20.0
      %vm1196 = vcmp.gt.f32.partialorder %v1188, 20.0
      %vm1197 = vcmp.gt.f32.partialorder %v1189, 20.0
      %vm1198 = vcmp.gt.f32.partialorder %v1190, 20.0
      %vm1199 = vcmp.gt.f32.partialorder %v1191, 20.0
      %vm1200 = vcmp.gt.f32.partialorder %v1192, 20.0
      %vm1201 = vcmp.gt.f32.partialorder %v1193, 20.0
      %v1202 = vmin.f32 %v1186, 20.0
      %v1203 = vmin.f32 %v1187, 20.0
      %v1204 = vmin.f32 %v1188, 20.0
      %v1205 = vmin.f32 %v1189, 20.0
      %v1206 = vmin.f32 %v1190, 20.0
      %v1207 = vmin.f32 %v1191, 20.0
      %v1208 = vmin.f32 %v1192, 20.0
      %v1209 = vmin.f32 %v1193, 20.0
      %v1210 = vmul.f32 %v1202, 1.442695
      %v1211 = vpow.pop %v1210
      %v1212 = vmul.f32 %v1203, 1.442695
      %v1213 = vpow.pop %v1212
      %v1214 = vmul.f32 %v1204, 1.442695
      %v1215 = vpow.pop %v1214
      %v1216 = vmul.f32 %v1205, 1.442695
      %v1217 = vpow.pop %v1216
      %v1218 = vmul.f32 %v1206, 1.442695
      %v1219 = vpow.pop %v1218
      %v1220 = vmul.f32 %v1207, 1.442695
      %v1221 = vpow.pop %v1220
      %v1222 = vmul.f32 %v1208, 1.442695
      %v1223 = vpow.pop %v1222
      %v1224 = vmul.f32 %v1209, 1.442695
      %v1225 = vpow.pop %v1224
      %v1226 = vadd.f32 %v1211, 1.0
      %v1227 = vlog2.pop %v1226
      %v1228 = vmul.f32 %v1227, 0.6931472
      %v1229 = vmul.f32 -0.5, %v1211
      %v1230 = vadd.f32 %v1229, 1.0
      %v1231 = vmul.f32 %v1230, %v1211
      %v1232 = vand.u32 2147483647, %v1211
      %vm1233 = vcmp.lt.f32.partialorder %v1232, 0.0004427343
      %v1234 = vsel %vm1233, %v1231, %v1228
      %v1235 = vadd.f32 %v1213, 1.0
      %v1236 = vlog2.pop %v1235
      %v1237 = vmul.f32 %v1236, 0.6931472
      %v1238 = vmul.f32 -0.5, %v1213
      %v1239 = vadd.f32 %v1238, 1.0
      %v1240 = vmul.f32 %v1239, %v1213
      %v1241 = vand.u32 2147483647, %v1213
      %vm1242 = vcmp.lt.f32.partialorder %v1241, 0.0004427343
      %v1243 = vsel %vm1242, %v1240, %v1237
      %v1244 = vadd.f32 %v1215, 1.0
      %v1245 = vlog2.pop %v1244
      %v1246 = vmul.f32 %v1245, 0.6931472
      %v1247 = vmul.f32 -0.5, %v1215
      %v1248 = vadd.f32 %v1247, 1.0
      %v1249 = vmul.f32 %v1248, %v1215
      %v1250 = vand.u32 2147483647, %v1215
      %vm1251 = vcmp.lt.f32.partialorder %v1250, 0.0004427343
      %v1252 = vsel %vm1251, %v1249, %v1246
      %v1253 = vadd.f32 %v1217, 1.0
      %v1254 = vlog2.pop %v1253
      %v1255 = vmul.f32 %v1254, 0.6931472
      %v1256 = vmul.f32 -0.5, %v1217
      %v1257 = vadd.f32 %v1256, 1.0
      %v1258 = vmul.f32 %v1257, %v1217
      %v1259 = vand.u32 2147483647, %v1217
      %vm1260 = vcmp.lt.f32.partialorder %v1259, 0.0004427343
      %v1261 = vsel %vm1260, %v1258, %v1255
      %v1262 = vadd.f32 %v1219, 1.0
      %v1263 = vlog2.pop %v1262
      %v1264 = vmul.f32 %v1263, 0.6931472
      %v1265 = vmul.f32 -0.5, %v1219
      %v1266 = vadd.f32 %v1265, 1.0
      %v1267 = vmul.f32 %v1266, %v1219
      %v1268 = vand.u32 2147483647, %v1219
      %vm1269 = vcmp.lt.f32.partialorder %v1268, 0.0004427343
      %v1270 = vsel %vm1269, %v1267, %v1264
      %v1271 = vadd.f32 %v1221, 1.0
      %v1272 = vlog2.pop %v1271
      %v1273 = vmul.f32 %v1272, 0.6931472
      %v1274 = vmul.f32 -0.5, %v1221
      %v1275 = vadd.f32 %v1274, 1.0
      %v1276 = vmul.f32 %v1275, %v1221
      %v1277 = vand.u32 2147483647, %v1221
      %vm1278 = vcmp.lt.f32.partialorder %v1277, 0.0004427343
      %v1279 = vsel %vm1278, %v1276, %v1273
      %v1280 = vadd.f32 %v1223, 1.0
      %v1281 = vlog2.pop %v1280
      %v1282 = vmul.f32 %v1281, 0.6931472
      %v1283 = vmul.f32 -0.5, %v1223
      %v1284 = vadd.f32 %v1283, 1.0
      %v1285 = vmul.f32 %v1284, %v1223
      %v1286 = vand.u32 2147483647, %v1223
      %vm1287 = vcmp.lt.f32.partialorder %v1286, 0.0004427343
      %v1288 = vsel %vm1287, %v1285, %v1282
      %v1289 = vadd.f32 %v1225, 1.0
      %v1290 = vlog2.pop %v1289
      %v1291 = vmul.f32 %v1290, 0.6931472
      %v1292 = vmul.f32 -0.5, %v1225
      %v1293 = vadd.f32 %v1292, 1.0
      %v1294 = vmul.f32 %v1293, %v1225
      %v1295 = vand.u32 2147483647, %v1225
      %vm1296 = vcmp.lt.f32.partialorder %v1295, 0.0004427343
      %v1297 = vsel %vm1296, %v1294, %v1291
      %v1298 = vsel %vm1194, %v1186, %v1234
      %v1299 = vsel %vm1195, %v1187, %v1243
      %v1300 = vsel %vm1196, %v1188, %v1252
      %v1301 = vsel %vm1197, %v1189, %v1261
      %v1302 = vsel %vm1198, %v1190, %v1270
      %v1303 = vsel %vm1199, %v1191, %v1279
      %v1304 = vsel %vm1200, %v1192, %v1288
      %v1305 = vsel %vm1201, %v1193, %v1297
      %1306 = vst.msk [vmem:[#allocation4] sm:$0xff] %vm723, %v1298
      %1307 = vst.msk [vmem:[#allocation4 + $0x8] sm:$0xff] %vm723, %v1299
      %1308 = vst.msk [vmem:[#allocation4 + $0x10] sm:$0xff] %vm723, %v1300
      %1309 = vst.msk [vmem:[#allocation4 + $0x18] sm:$0xff] %vm723, %v1301
      %1310 = vst.msk [vmem:[#allocation4 + $0x20] sm:$0xff] %vm723, %v1302
      %1311 = vst.msk [vmem:[#allocation4 + $0x28] sm:$0xff] %vm723, %v1303
      %1312 = vst.msk [vmem:[#allocation4 + $0x30] sm:$0xff] %vm723, %v1304
      %1313 = vst.msk [vmem:[#allocation4 + $0x38] sm:$0xff] %vm723, %v1305
      %v1314 = vld [vmem:[%s9] sm:$0xff]
      %v1315 = vld [vmem:[%s9 + $0x8] sm:$0xff]
      %v1316 = vld [vmem:[%s10] sm:$0x1]
      loop: start=0, step=1, limit=8
      $region69: #{tpu_custom_call.1} parent=67 // loop_pre_header
        _
      $region70: #{tpu_custom_call.1} parent=67 // loop_header
        %s1318 = sphi 0, %s1322
        %p1319 = scmp.ge.s32.totalorder %s1318, 8
        %v1323 = vphi 0.0, %v1726
        %v1324 = vphi 0.0, %v1727
      $region71: #{tpu_custom_call.1} parent=67 // loop_header_branch
        %1321 = sbr.rel (%p1319) target = $region75
      $region72: #{tpu_custom_call.1} parent=67 // loop_body
        %s1325 = smul.u32 %s1318, 8
        %s1326 = scalar_lea.vmem [#allocation4], %s1325
        %v1327 = vld [vmem:[%s1326] sm:$0xff]
        %s1328 = scalar_lea.vmem [#allocation5], %s1325
        %v1329 = vld [vmem:[%s1328] sm:$0xff]
        %s1330 = scalar_lea.vmem [#allocation6], %s1325
        %v1331 = vld [vmem:[%s1330] sm:$0xff]
        %v1332 = vmul.f32 %v1327, %v1329
        %s1333 = scalar_lea.vmem [#allocation3], %s1325
        %v1334 = vld [vmem:[%s1333] sm:$0xff]
        %1335 = vxpose.xlu0.b32.start [1/16] %v1334, 128
        %1336 = vxpose.xlu0.b32.cont [2/16] 0.0, 128
        %1337 = vxpose.xlu0.b32.cont [3/16] 0.0, 128
        %1338 = vxpose.xlu0.b32.cont [4/16] 0.0, 128
        %1339 = vxpose.xlu0.b32.cont [5/16] 0.0, 128
        %1340 = vxpose.xlu0.b32.cont [6/16] 0.0, 128
        %1341 = vxpose.xlu0.b32.cont [7/16] 0.0, 128
        %1342 = vxpose.xlu0.b32.cont [8/16] 0.0, 128
        %1343 = vxpose.xlu0.b32.cont [9/16] 0.0, 128
        %1344 = vxpose.xlu0.b32.cont [10/16] 0.0, 128
        %1345 = vxpose.xlu0.b32.cont [11/16] 0.0, 128
        %1346 = vxpose.xlu0.b32.cont [12/16] 0.0, 128
        %1347 = vxpose.xlu0.b32.cont [13/16] 0.0, 128
        %1348 = vxpose.xlu0.b32.cont [14/16] 0.0, 128
        %1349 = vxpose.xlu0.b32.cont [15/16] 0.0, 128
        %1350 = vxpose.xlu0.b32.end [16/16] 0.0, 128
        %v1351 = vpop.trf.xlu0
        %v1352 = vpop.trf.xlu0
        %v1353 = vpop.trf.xlu0
        %v1354 = vpop.trf.xlu0
        %v1355 = vpop.trf.xlu0
        %v1356 = vpop.trf.xlu0
        %v1357 = vpop.trf.xlu0
        %v1358 = vpop.trf.xlu0
        %v1359 = vpop.trf.xlu0
        %v1360 = vpop.trf.xlu0
        %v1361 = vpop.trf.xlu0
        %v1362 = vpop.trf.xlu0
        %v1363 = vpop.trf.xlu0
        %v1364 = vpop.trf.xlu0
        %v1365 = vpop.trf.xlu0
        %v1366 = vpop.trf.xlu0
        %v1367 = vlaneseq
        %v1368 = vshrl.u32 %v1367, 7
        %v1369 = vsub.s32 0, %v1368
        %v1370 = vrot.slane %v1327, %v1369
        %v1371 = vmul.f32 %v1370, %v1314
        %v1372 = vmul.f32 %v1370, %v1315
        %v1373 = vmul.f32 %v1371, 1.442695
        %v1374 = vpow.pop %v1373
        %v1375 = vmul.f32 %v1372, 1.442695
        %v1376 = vpow.pop %v1375
        %v1377 = vlaneseq
        %v1378 = vshrl.u32 %v1377, 7
        %v1379 = vsub.s32 0, %v1378
        %v1380 = vrot.slane %v1332, %v1379
        %1382 = vset.pattern.permute.xlu0 0
        %1383 = vperm.xlu0 %1382, %v1351
        %v1384 = vpop.permute.xlu0 %1383
        %1387 = vset.pattern.permute.xlu0 0
        %1388 = vperm.xlu0 %1387, %v1352
        %v1389 = vpop.permute.xlu0 %1388
        %v1391 = vmul.f32 %v1380, %v1384
        %v1392 = vmul.f32 %v1380, %v1389
        %v1393 = vmul.f32 %v1374, %v1323
        %v1394 = vmul.f32 %v1376, %v1324
        %v1395 = vadd.f32 %v1393, %v1391
        %v1396 = vadd.f32 %v1394, %v1392
        %1398 = vset.pattern.permute.xlu0 0
        %1399 = vperm.xlu0 %1398, %v1353
        %v1400 = vpop.permute.xlu0 %1399
        %1403 = vset.pattern.permute.xlu0 0
        %1404 = vperm.xlu0 %1403, %v1354
        %v1405 = vpop.permute.xlu0 %1404
        %v1407 = vmul.f32 %v1400, %v1395
        %v1408 = vmul.f32 %v1405, %v1396
        %v1409 = vsel %vm723, %v1407, 0.0
        %v1410 = vsel %vm723, %v1408, 0.0
        %v1411 = vadd.f32 %v1409, %v1410
        %v1412 = vrot.slane %v1411, 4
        %v1413 = vadd.f32 %v1411, %v1412
        %v1414 = vrot.slane %v1413, 2
        %v1415 = vadd.f32 %v1413, %v1414
        %v1416 = vrot.slane %v1415, 1
        %v1417 = vadd.f32 %v1415, %v1416
        %v1418 = vlaneseq
        %v1419 = vshrl.u32 %v1418, 7
        %v1420 = vsub.s32 1, %v1419
        %v1421 = vrot.slane %v1327, %v1420
        %v1422 = vmul.f32 %v1421, %v1314
        %v1423 = vmul.f32 %v1421, %v1315
        %v1424 = vmul.f32 %v1422, 1.442695
        %v1425 = vpow.pop %v1424
        %v1426 = vmul.f32 %v1423, 1.442695
        %v1427 = vpow.pop %v1426
        %v1428 = vlaneseq
        %v1429 = vshrl.u32 %v1428, 7
        %v1430 = vsub.s32 1, %v1429
        %v1431 = vrot.slane %v1332, %v1430
        %1432 = vset.pattern.permute.xlu0 1
        %1433 = vperm.xlu0 %1432, %v1351
        %v1434 = vpop.permute.xlu0 %1433
        %1436 = vset.pattern.permute.xlu0 1
        %1437 = vperm.xlu0 %1436, %v1352
        %v1438 = vpop.permute.xlu0 %1437
        %v1440 = vmul.f32 %v1431, %v1434
        %v1441 = vmul.f32 %v1431, %v1438
        %v1442 = vmul.f32 %v1425, %v1395
        %v1443 = vmul.f32 %v1427, %v1396
        %v1444 = vadd.f32 %v1442, %v1440
        %v1445 = vadd.f32 %v1443, %v1441
        %1446 = vset.pattern.permute.xlu0 1
        %1447 = vperm.xlu0 %1446, %v1353
        %v1448 = vpop.permute.xlu0 %1447
        %1450 = vset.pattern.permute.xlu0 1
        %1451 = vperm.xlu0 %1450, %v1354
        %v1452 = vpop.permute.xlu0 %1451
        %v1454 = vmul.f32 %v1448, %v1444
        %v1455 = vmul.f32 %v1452, %v1445
        %v1456 = vsel %vm723, %v1454, 0.0
        %v1457 = vsel %vm723, %v1455, 0.0
        %v1458 = vadd.f32 %v1456, %v1457
        %v1459 = vrot.slane %v1458, 4
        %v1460 = vadd.f32 %v1458, %v1459
        %v1461 = vrot.slane %v1460, 2
        %v1462 = vadd.f32 %v1460, %v1461
        %v1463 = vrot.slane %v1462, 1
        %v1464 = vadd.f32 %v1462, %v1463
        %v1465 = vlaneseq
        %v1466 = vshrl.u32 %v1465, 7
        %v1467 = vsub.s32 2, %v1466
        %v1468 = vrot.slane %v1327, %v1467
        %v1469 = vmul.f32 %v1468, %v1314
        %v1470 = vmul.f32 %v1468, %v1315
        %v1471 = vmul.f32 %v1469, 1.442695
        %v1472 = vpow.pop %v1471
        %v1473 = vmul.f32 %v1470, 1.442695
        %v1474 = vpow.pop %v1473
        %v1475 = vlaneseq
        %v1476 = vshrl.u32 %v1475, 7
        %v1477 = vsub.s32 2, %v1476
        %v1478 = vrot.slane %v1332, %v1477
        %1479 = vset.pattern.permute.xlu0 2
        %1480 = vperm.xlu0 %1479, %v1351
        %v1481 = vpop.permute.xlu0 %1480
        %1483 = vset.pattern.permute.xlu0 2
        %1484 = vperm.xlu0 %1483, %v1352
        %v1485 = vpop.permute.xlu0 %1484
        %v1487 = vmul.f32 %v1478, %v1481
        %v1488 = vmul.f32 %v1478, %v1485
        %v1489 = vmul.f32 %v1472, %v1444
        %v1490 = vmul.f32 %v1474, %v1445
        %v1491 = vadd.f32 %v1489, %v1487
        %v1492 = vadd.f32 %v1490, %v1488
        %1493 = vset.pattern.permute.xlu0 2
        %1494 = vperm.xlu0 %1493, %v1353
        %v1495 = vpop.permute.xlu0 %1494
        %1497 = vset.pattern.permute.xlu0 2
        %1498 = vperm.xlu0 %1497, %v1354
        %v1499 = vpop.permute.xlu0 %1498
        %v1501 = vmul.f32 %v1495, %v1491
        %v1502 = vmul.f32 %v1499, %v1492
        %v1503 = vsel %vm723, %v1501, 0.0
        %v1504 = vsel %vm723, %v1502, 0.0
        %v1505 = vadd.f32 %v1503, %v1504
        %v1506 = vrot.slane %v1505, 4
        %v1507 = vadd.f32 %v1505, %v1506
        %v1508 = vrot.slane %v1507, 2
        %v1509 = vadd.f32 %v1507, %v1508
        %v1510 = vrot.slane %v1509, 1
        %v1511 = vadd.f32 %v1509, %v1510
        %v1512 = vlaneseq
        %v1513 = vshrl.u32 %v1512, 7
        %v1514 = vsub.s32 3, %v1513
        %v1515 = vrot.slane %v1327, %v1514
        %v1516 = vmul.f32 %v1515, %v1314
        %v1517 = vmul.f32 %v1515, %v1315
        %v1518 = vmul.f32 %v1516, 1.442695
        %v1519 = vpow.pop %v1518
        %v1520 = vmul.f32 %v1517, 1.442695
        %v1521 = vpow.pop %v1520
        %v1522 = vlaneseq
        %v1523 = vshrl.u32 %v1522, 7
        %v1524 = vsub.s32 3, %v1523
        %v1525 = vrot.slane %v1332, %v1524
        %1526 = vset.pattern.permute.xlu0 3
        %1527 = vperm.xlu0 %1526, %v1351
        %v1528 = vpop.permute.xlu0 %1527
        %1530 = vset.pattern.permute.xlu0 3
        %1531 = vperm.xlu0 %1530, %v1352
        %v1532 = vpop.permute.xlu0 %1531
        %v1534 = vmul.f32 %v1525, %v1528
        %v1535 = vmul.f32 %v1525, %v1532
        %v1536 = vmul.f32 %v1519, %v1491
        %v1537 = vmul.f32 %v1521, %v1492
        %v1538 = vadd.f32 %v1536, %v1534
        %v1539 = vadd.f32 %v1537, %v1535
        %1540 = vset.pattern.permute.xlu0 3
        %1541 = vperm.xlu0 %1540, %v1353
        %v1542 = vpop.permute.xlu0 %1541
        %1544 = vset.pattern.permute.xlu0 3
        %1545 = vperm.xlu0 %1544, %v1354
        %v1546 = vpop.permute.xlu0 %1545
        %v1548 = vmul.f32 %v1542, %v1538
        %v1549 = vmul.f32 %v1546, %v1539
        %v1550 = vsel %vm723, %v1548, 0.0
        %v1551 = vsel %vm723, %v1549, 0.0
        %v1552 = vadd.f32 %v1550, %v1551
        %v1553 = vrot.slane %v1552, 4
        %v1554 = vadd.f32 %v1552, %v1553
        %v1555 = vrot.slane %v1554, 2
        %v1556 = vadd.f32 %v1554, %v1555
        %v1557 = vrot.slane %v1556, 1
        %v1558 = vadd.f32 %v1556, %v1557
        %v1559 = vlaneseq
        %v1560 = vshrl.u32 %v1559, 7
        %v1561 = vsub.s32 4, %v1560
        %v1562 = vrot.slane %v1327, %v1561
        %v1563 = vmul.f32 %v1562, %v1314
        %v1564 = vmul.f32 %v1562, %v1315
        %v1565 = vmul.f32 %v1563, 1.442695
        %v1566 = vpow.pop %v1565
        %v1567 = vmul.f32 %v1564, 1.442695
        %v1568 = vpow.pop %v1567
        %v1569 = vlaneseq
        %v1570 = vshrl.u32 %v1569, 7
        %v1571 = vsub.s32 4, %v1570
        %v1572 = vrot.slane %v1332, %v1571
        %1573 = vset.pattern.permute.xlu0 4
        %1574 = vperm.xlu0 %1573, %v1351
        %v1575 = vpop.permute.xlu0 %1574
        %1577 = vset.pattern.permute.xlu0 4
        %1578 = vperm.xlu0 %1577, %v1352
        %v1579 = vpop.permute.xlu0 %1578
        %v1581 = vmul.f32 %v1572, %v1575
        %v1582 = vmul.f32 %v1572, %v1579
        %v1583 = vmul.f32 %v1566, %v1538
        %v1584 = vmul.f32 %v1568, %v1539
        %v1585 = vadd.f32 %v1583, %v1581
        %v1586 = vadd.f32 %v1584, %v1582
        %1587 = vset.pattern.permute.xlu0 4
        %1588 = vperm.xlu0 %1587, %v1353
        %v1589 = vpop.permute.xlu0 %1588
        %1591 = vset.pattern.permute.xlu0 4
        %1592 = vperm.xlu0 %1591, %v1354
        %v1593 = vpop.permute.xlu0 %1592
        %v1595 = vmul.f32 %v1589, %v1585
        %v1596 = vmul.f32 %v1593, %v1586
        %v1597 = vsel %vm723, %v1595, 0.0
        %v1598 = vsel %vm723, %v1596, 0.0
        %v1599 = vadd.f32 %v1597, %v1598
        %v1600 = vrot.slane %v1599, 4
        %v1601 = vadd.f32 %v1599, %v1600
        %v1602 = vrot.slane %v1601, 2
        %v1603 = vadd.f32 %v1601, %v1602
        %v1604 = vrot.slane %v1603, 1
        %v1605 = vadd.f32 %v1603, %v1604
        %v1606 = vlaneseq
        %v1607 = vshrl.u32 %v1606, 7
        %v1608 = vsub.s32 5, %v1607
        %v1609 = vrot.slane %v1327, %v1608
        %v1610 = vmul.f32 %v1609, %v1314
        %v1611 = vmul.f32 %v1609, %v1315
        %v1612 = vmul.f32 %v1610, 1.442695
        %v1613 = vpow.pop %v1612
        %v1614 = vmul.f32 %v1611, 1.442695
        %v1615 = vpow.pop %v1614
        %v1616 = vlaneseq
        %v1617 = vshrl.u32 %v1616, 7
        %v1618 = vsub.s32 5, %v1617
        %v1619 = vrot.slane %v1332, %v1618
        %1620 = vset.pattern.permute.xlu0 5
        %1621 = vperm.xlu0 %1620, %v1351
        %v1622 = vpop.permute.xlu0 %1621
        %1624 = vset.pattern.permute.xlu0 5
        %1625 = vperm.xlu0 %1624, %v1352
        %v1626 = vpop.permute.xlu0 %1625
        %v1628 = vmul.f32 %v1619, %v1622
        %v1629 = vmul.f32 %v1619, %v1626
        %v1630 = vmul.f32 %v1613, %v1585
        %v1631 = vmul.f32 %v1615, %v1586
        %v1632 = vadd.f32 %v1630, %v1628
        %v1633 = vadd.f32 %v1631, %v1629
        %1634 = vset.pattern.permute.xlu0 5
        %1635 = vperm.xlu0 %1634, %v1353
        %v1636 = vpop.permute.xlu0 %1635
        %1638 = vset.pattern.permute.xlu0 5
        %1639 = vperm.xlu0 %1638, %v1354
        %v1640 = vpop.permute.xlu0 %1639
        %v1642 = vmul.f32 %v1636, %v1632
        %v1643 = vmul.f32 %v1640, %v1633
        %v1644 = vsel %vm723, %v1642, 0.0
        %v1645 = vsel %vm723, %v1643, 0.0
        %v1646 = vadd.f32 %v1644, %v1645
        %v1647 = vrot.slane %v1646, 4
        %v1648 = vadd.f32 %v1646, %v1647
        %v1649 = vrot.slane %v1648, 2
        %v1650 = vadd.f32 %v1648, %v1649
        %v1651 = vrot.slane %v1650, 1
        %v1652 = vadd.f32 %v1650, %v1651
        %v1653 = vlaneseq
        %v1654 = vshrl.u32 %v1653, 7
        %v1655 = vsub.s32 6, %v1654
        %v1656 = vrot.slane %v1327, %v1655
        %v1657 = vmul.f32 %v1656, %v1314
        %v1658 = vmul.f32 %v1656, %v1315
        %v1659 = vmul.f32 %v1657, 1.442695
        %v1660 = vpow.pop %v1659
        %v1661 = vmul.f32 %v1658, 1.442695
        %v1662 = vpow.pop %v1661
        %v1663 = vlaneseq
        %v1664 = vshrl.u32 %v1663, 7
        %v1665 = vsub.s32 6, %v1664
        %v1666 = vrot.slane %v1332, %v1665
        %1667 = vset.pattern.permute.xlu0 6
        %1668 = vperm.xlu0 %1667, %v1351
        %v1669 = vpop.permute.xlu0 %1668
        %1671 = vset.pattern.permute.xlu0 6
        %1672 = vperm.xlu0 %1671, %v1352
        %v1673 = vpop.permute.xlu0 %1672
        %v1675 = vmul.f32 %v1666, %v1669
        %v1676 = vmul.f32 %v1666, %v1673
        %v1677 = vmul.f32 %v1660, %v1632
        %v1678 = vmul.f32 %v1662, %v1633
        %v1679 = vadd.f32 %v1677, %v1675
        %v1680 = vadd.f32 %v1678, %v1676
        %1681 = vset.pattern.permute.xlu0 6
        %1682 = vperm.xlu0 %1681, %v1353
        %v1683 = vpop.permute.xlu0 %1682
        %1685 = vset.pattern.permute.xlu0 6
        %1686 = vperm.xlu0 %1685, %v1354
        %v1687 = vpop.permute.xlu0 %1686
        %v1689 = vmul.f32 %v1683, %v1679
        %v1690 = vmul.f32 %v1687, %v1680
        %v1691 = vsel %vm723, %v1689, 0.0
        %v1692 = vsel %vm723, %v1690, 0.0
        %v1693 = vadd.f32 %v1691, %v1692
        %v1694 = vrot.slane %v1693, 4
        %v1695 = vadd.f32 %v1693, %v1694
        %v1696 = vrot.slane %v1695, 2
        %v1697 = vadd.f32 %v1695, %v1696
        %v1698 = vrot.slane %v1697, 1
        %v1699 = vadd.f32 %v1697, %v1698
        %v1700 = vlaneseq
        %v1701 = vshrl.u32 %v1700, 7
        %v1702 = vsub.s32 7, %v1701
        %v1703 = vrot.slane %v1327, %v1702
        %v1704 = vmul.f32 %v1703, %v1314
        %v1705 = vmul.f32 %v1703, %v1315
        %v1706 = vmul.f32 %v1704, 1.442695
        %v1707 = vpow.pop %v1706
        %v1708 = vmul.f32 %v1705, 1.442695
        %v1709 = vpow.pop %v1708
        %v1710 = vlaneseq
        %v1711 = vshrl.u32 %v1710, 7
        %v1712 = vsub.s32 7, %v1711
        %v1713 = vrot.slane %v1332, %v1712
        %1714 = vset.pattern.permute.xlu0 7
        %1715 = vperm.xlu0 %1714, %v1351
        %v1716 = vpop.permute.xlu0 %1715
        %1718 = vset.pattern.permute.xlu0 7
        %1719 = vperm.xlu0 %1718, %v1352
        %v1720 = vpop.permute.xlu0 %1719
        %v1722 = vmul.f32 %v1713, %v1716
        %v1723 = vmul.f32 %v1713, %v1720
        %v1724 = vmul.f32 %v1707, %v1679
        %v1725 = vmul.f32 %v1709, %v1680
        %v1726 = vadd.f32 %v1724, %v1722
        %v1727 = vadd.f32 %v1725, %v1723
        %1728 = vset.pattern.permute.xlu0 7
        %1729 = vperm.xlu0 %1728, %v1353
        %v1730 = vpop.permute.xlu0 %1729
        %1732 = vset.pattern.permute.xlu0 7
        %1733 = vperm.xlu0 %1732, %v1354
        %v1734 = vpop.permute.xlu0 %1733
        %v1736 = vmul.f32 %v1730, %v1726
        %v1737 = vmul.f32 %v1734, %v1727
        %v1738 = vsel %vm723, %v1736, 0.0
        %v1739 = vsel %vm723, %v1737, 0.0
        %v1740 = vadd.f32 %v1738, %v1739
        %v1741 = vrot.slane %v1740, 4
        %v1742 = vadd.f32 %v1740, %v1741
        %v1743 = vrot.slane %v1742, 2
        %v1744 = vadd.f32 %v1742, %v1743
        %v1745 = vrot.slane %v1744, 1
        %v1746 = vadd.f32 %v1744, %v1745
        %vm1747 = vcmask 1040384
        %v1748 = vsel %vm1747, %v1417, %v1464
        %vm1749 = vcmask 1041408
        %v1750 = vsel %vm1749, %v1748, %v1511
        %vm1751 = vcmask 1042432
        %v1752 = vsel %vm1751, %v1750, %v1558
        %vm1753 = vcmask 1043456
        %v1754 = vsel %vm1753, %v1752, %v1605
        %vm1755 = vcmask 1044480
        %v1756 = vsel %vm1755, %v1754, %v1652
        %vm1757 = vcmask 1045504
        %v1758 = vsel %vm1757, %v1756, %v1699
        %vm1759 = vcmask 1046528
        %v1760 = vsel %vm1759, %v1758, %v1746
        %v1762 = vlaneseq
        %v1763 = vshrl.u32 %v1762, 7
        %v1764 = vsub.s32 0, %v1763
        %v1765 = vrot.slane %v1316, %v1764
        %v1767 = vmul.f32 %v1329, %v1765
        %v1768 = vadd.f32 %v1760, %v1767
        %v1769 = vxor.u32 %v1331, 2147483648
        %v1770 = vmul.f32 %v1769, 1.442695
        %v1771 = vpow.pop %v1770
        %v1772 = vadd.f32 %v1771, 1.0
        %v1773 = vrcp.pop %v1772
        %v1774 = vmul.f32 1.0, %v1773
        %v1775 = vmul.f32 %v1331, %v1774
        %v1776 = vmul.f32 %v1768, %v1775
        %s1777 = scalar_lea.vmem [#allocation7], %s1325
        %1778 = vst.msk [vmem:[%s1777] sm:$0xff] %vm723, %v1776
      $region73: #{tpu_custom_call.1} parent=67 // loop_footer
        %s1322 = sadd.s32 1, %s1318
      $region74: #{tpu_custom_call.1} parent=67 // loop_footer_branch
        %1317 = sbr.rel target = $region70
      $region75: #{tpu_custom_call.1} parent=67 // loop_exit
        _
      %v1779 = vld [vmem:[#allocation7] sm:$0xff]
      %v1780 = vld [vmem:[#allocation7 + $0x8] sm:$0xff]
      %v1781 = vld [vmem:[#allocation7 + $0x10] sm:$0xff]
      %v1782 = vld [vmem:[#allocation7 + $0x18] sm:$0xff]
      %v1783 = vld [vmem:[#allocation7 + $0x20] sm:$0xff]
      %v1784 = vld [vmem:[#allocation7 + $0x28] sm:$0xff]
      %v1785 = vld [vmem:[#allocation7 + $0x30] sm:$0xff]
      %v1786 = vld [vmem:[#allocation7 + $0x38] sm:$0xff]
      %v1787 = vld [vmem:[%s11] sm:$0xff]
      %v1788 = vld [vmem:[%s11 + $0x8] sm:$0xff]
      %v1789 = vld [vmem:[%s11 + $0x10] sm:$0xff]
      %v1790 = vld [vmem:[%s11 + $0x18] sm:$0xff]
      %v1791 = vld [vmem:[%s11 + $0x20] sm:$0xff]
      %v1792 = vld [vmem:[%s11 + $0x28] sm:$0xff]
      %v1793 = vld [vmem:[%s11 + $0x30] sm:$0xff]
      %v1794 = vld [vmem:[%s11 + $0x38] sm:$0xff]
      %v1796 = vsel %vm723, %v1779, 0
      %v1799 = vsel %vm723, %v1780, 0
      %v1802 = vsel %vm723, %v1781, 0
      %v1805 = vsel %vm723, %v1782, 0
      %v1808 = vsel %vm723, %v1783, 0
      %v1811 = vsel %vm723, %v1784, 0
      %v1814 = vsel %vm723, %v1785, 0
      %v1817 = vsel %vm723, %v1786, 0
      %1819 = vmatprep.subr.mxu0 0.0
      %1820 = vmatpush1.msra.mxu0 %v1787
      %1821 = vmatprep.subr.mxu0 0.0
      %1822 = vmatpush1.msra.mxu0 %v1788
      %1823 = vmatprep.subr.mxu0 0.0
      %1824 = vmatpush1.msra.mxu0 %v1789
      %1825 = vmatprep.subr.mxu0 0.0
      %1826 = vmatpush1.msra.mxu0 %v1790
      %1827 = vmatprep.subr.mxu0 0.0
      %1828 = vmatpush1.msra.mxu0 %v1791
      %1829 = vmatprep.subr.mxu0 0.0
      %1830 = vmatpush1.msra.mxu0 %v1792
      %1831 = vmatprep.subr.mxu0 0.0
      %1832 = vmatpush1.msra.mxu0 %v1793
      %1833 = vmatprep.subr.mxu0 0.0
      %1834 = vmatpush1.msra.mxu0 %v1794
      %1835 = vmatprep.subr.mxu0 0.0
      %1836 = vmatpush1.msra.mxu0 0.0
      %1837 = vmatprep.subr.mxu0 0.0
      %1838 = vmatpush1.msra.mxu0 0.0
      %1839 = vmatprep.subr.mxu0 0.0
      %1840 = vmatpush1.msra.mxu0 0.0
      %1841 = vmatprep.subr.mxu0 0.0
      %1842 = vmatpush1.msra.mxu0 0.0
      %1843 = vmatprep.subr.mxu0 0.0
      %1844 = vmatpush1.msra.mxu0 0.0
      %1845 = vmatprep.subr.mxu0 0.0
      %1846 = vmatpush1.msra.mxu0 0.0
      %1847 = vmatprep.subr.mxu0 0.0
      %1848 = vmatpush1.msra.mxu0 0.0
      %1849 = vmatprep.subr.mxu0 0.0
      %1850 = vmatpush1.msra.mxu0 0.0
      %1851 = vmatprep.subr.mxu0 0.0
      %1852 = vmatpush1.msra.mxu0 0.0
      %1853 = vmatprep.subr.mxu0 0.0
      %1854 = vmatpush1.msra.mxu0 0.0
      %1855 = vmatprep.subr.mxu0 0.0
      %1856 = vmatpush1.msra.mxu0 0.0
      %1857 = vmatprep.subr.mxu0 0.0
      %1858 = vmatpush1.msra.mxu0 0.0
      %1859 = vmatprep.subr.mxu0 0.0
      %1860 = vmatpush1.msra.mxu0 0.0
      %1861 = vmatprep.subr.mxu0 0.0
      %1862 = vmatpush1.msra.mxu0 0.0
      %1863 = vmatprep.subr.mxu0 0.0
      %1864 = vmatpush1.msra.mxu0 0.0
      %1865 = vmatprep.subr.mxu0 0.0
      %1866 = vmatpush1.msra.mxu0 0.0
      %1867 = vmatprep.subr.mxu0 0.0
      %1868 = vmatpush1.msra.mxu0 0.0
      %1869 = vmatprep.subr.mxu0 0.0
      %1870 = vmatpush1.msra.mxu0 0.0
      %1871 = vmatprep.subr.mxu0 0.0
      %1872 = vmatpush1.msra.mxu0 0.0
      %1873 = vmatprep.subr.mxu0 0.0
      %1874 = vmatpush1.msra.mxu0 0.0
      %1875 = vmatprep.subr.mxu0 0.0
      %1876 = vmatpush1.msra.mxu0 0.0
      %1877 = vmatprep.subr.mxu0 0.0
      %1878 = vmatpush1.msra.mxu0 0.0
      %1879 = vmatprep.subr.mxu0 0.0
      %1880 = vmatpush1.msra.mxu0 0.0
      %1881 = vmatprep.subr.mxu0 0.0
      %1882 = vmatpush1.msra.mxu0 0.0
      %1883 = vmatprep.mubr.f32.mxu0 0.0
      %1884 = vmatmul.mubr.f32.gmra.mrb[0].mxu0 %v1796
      %v1885 = vpop.f32.mrb[0].mxu0
      %v1886 = vadd.f32 0.0, %v1885
      %v1887 = vpop.f32.mrb[0].mxu0
      %1888 = vmatprep.mubr.f32.mxu0 0.0
      %1889 = vmatmul.mubr.f32.gmra.mrb[0].mxu0 %v1799
      %v1890 = vpop.f32.mrb[0].mxu0
      %v1891 = vadd.f32 0.0, %v1890
      %v1892 = vpop.f32.mrb[0].mxu0
      %1893 = vmatprep.mubr.f32.mxu0 0.0
      %1894 = vmatmul.mubr.f32.gmra.mrb[0].mxu0 %v1802
      %v1895 = vpop.f32.mrb[0].mxu0
      %v1896 = vadd.f32 0.0, %v1895
      %v1897 = vpop.f32.mrb[0].mxu0
      %1898 = vmatprep.mubr.f32.mxu0 0.0
      %1899 = vmatmul.mubr.f32.gmra.mrb[0].mxu0 %v1805
      %v1900 = vpop.f32.mrb[0].mxu0
      %v1901 = vadd.f32 0.0, %v1900
      %v1902 = vpop.f32.mrb[0].mxu0
      %1903 = vmatprep.mubr.f32.mxu0 0.0
      %1904 = vmatmul.mubr.f32.gmra.mrb[0].mxu0 %v1808
      %v1905 = vpop.f32.mrb[0].mxu0
      %v1906 = vadd.f32 0.0, %v1905
      %v1907 = vpop.f32.mrb[0].mxu0
      %1908 = vmatprep.mubr.f32.mxu0 0.0
      %1909 = vmatmul.mubr.f32.gmra.mrb[0].mxu0 %v1811
      %v1910 = vpop.f32.mrb[0].mxu0
      %v1911 = vadd.f32 0.0, %v1910
      %v1912 = vpop.f32.mrb[0].mxu0
      %1913 = vmatprep.mubr.f32.mxu0 0.0
      %1914 = vmatmul.mubr.f32.gmra.mrb[0].mxu0 %v1814
      %v1915 = vpop.f32.mrb[0].mxu0
      %v1916 = vadd.f32 0.0, %v1915
      %v1917 = vpop.f32.mrb[0].mxu0
      %1918 = vmatprep.mubr.f32.mxu0 0.0
      %1919 = vmatmul.mubr.f32.gmra.mrb[0].mxu0 %v1817
      %v1920 = vpop.f32.mrb[0].mxu0
      %v1921 = vadd.f32 0.0, %v1920
      %v1922 = vpop.f32.mrb[0].mxu0
      %1923 = vdwg.mxu0
      %1924 = vst.msk [vmem:[%s413] sm:$0xff] %vm422, %v1886
      %1925 = vst.msk [vmem:[%s413 + $0x8] sm:$0xff] %vm422, %v1891
      %1926 = vst.msk [vmem:[%s413 + $0x10] sm:$0xff] %vm422, %v1896
      %1927 = vst.msk [vmem:[%s413 + $0x18] sm:$0xff] %vm422, %v1901
      %1928 = vst.msk [vmem:[%s413 + $0x20] sm:$0xff] %vm422, %v1906
      %1929 = vst.msk [vmem:[%s413 + $0x28] sm:$0xff] %vm422, %v1911
      %1930 = vst.msk [vmem:[%s413 + $0x30] sm:$0xff] %vm422, %v1916
      %1931 = vst.msk [vmem:[%s413 + $0x38] sm:$0xff] %vm422, %v1921
      %p1932 = scmp.lt.s32.totalorder %s23, 1
      %s1933 = scalar_select %p1932, %s23, 1
      %s1934 = smul.addr %s1933, 8
      %s1935 = smul.addr %s1934, 8
      %s1936 = scalar_lea.vmem %s12, %s1935
      // Predicated region
      $region76: #{tpu_custom_call.1} parent=67 // pred_check
        %p1937 = pneg %p298
      $region77: #{tpu_custom_call.1} parent=67 // pred_check_branch
        %1939 = sbr.rel (%p1937) target = $region79
      $region78: #{tpu_custom_call.1} parent=67 // pred_region
        _
      $region79: #{tpu_custom_call.1} parent=67 // pred_fallthru
        _
    $region68: #{tpu_custom_call.1} parent=5 // pred_fallthru
      _
    %p1940 = scmp.le.s32.totalorder 2, %s18
    // Predicated region
    $region80: #{tpu_custom_call.1} parent=5 // pred_check
      %p1941 = pneg %p1940
    $region81: #{tpu_custom_call.1} parent=5 // pred_check_branch
      %1943 = sbr.rel (%p1941) target = $region83
    $region82: #{tpu_custom_call.1} parent=5 // pred_region
      %s1944 = ssub.s32 %s18, 2
      // Predicated region
      $region84: #{tpu_custom_call.1} parent=82 // pred_check
        %p1945 = pneg %p304
      $region85: #{tpu_custom_call.1} parent=82 // pred_check_branch
        %1947 = sbr.rel (%p1945) target = $region87
      $region86: #{tpu_custom_call.1} parent=82 // pred_region
        %p1948 = scmp.lt.s32.totalorder %s24, 1
        %s1949 = scalar_select %p1948, %s24, 1
        %s1950 = smul.addr %s1949, 8
        %s1951 = smul.addr %s1950, 8
        %s1952 = scalar_lea.vmem %s12, %s1951
      $region87: #{tpu_custom_call.1} parent=82 // pred_fallthru
        _
    $region83: #{tpu_custom_call.1} parent=5 // pred_fallthru
      _
  $region6: #{tpu_custom_call.1} parent=0 // loop_footer
    %s22 = sadd.s32 1, %s18
  $region7: #{tpu_custom_call.1} parent=0 // loop_footer_branch
    %17 = sbr.rel target = $region3
  $region8: #{tpu_custom_call.1} parent=0 // loop_exit
    _

</llo_original>
